<compile_context>
chip_gen: v5e
topology: v5e:2x2
jax: 0.10.0
libtpu: 0.0.40
codegen_flags: <defaults>
</compile_context>

<pallas_src>
import functools
import math

import jax
import jax.numpy as jnp
from jax.experimental import pallas as pl
from jax.experimental.pallas import tpu as pltpu


def _round_up(x, m):
    return ((x + m - 1) // m) * m


def _vmem_limit_bytes():
    """Scoped VMEM limit: ~3/4 of physical (v7x: 64 MiB/TC), capped at 96 MiB."""
    try:
        cap = int(pltpu.get_tpu_info().vmem_capacity_bytes)
    except Exception:  # conservative fallback (assume v7x-sized VMEM)
        cap = 64 * 1024 * 1024
    return min((cap * 3) // 4, 96 * 1024 * 1024)


# ---------------------------------------------------------------------------
# Fused path: all 3 layers in one pallas_call, adjacency resident in VMEM.
# ---------------------------------------------------------------------------
def _fused_kernel(a_ref, invd_ref, x0_ref, wl_ref, wr_ref, b_ref,
                  out_ref, h_ref):
    layer = pl.program_id(0)

    @pl.when(layer == 0)
    def _():
        h_ref[0] = x0_ref[...]            # slot 0 <- input features (bf16)

    cur = layer % 2                        # read slot; write the other slot
    x_in = h_ref[cur]                      # (n_pad, d) bf16
    a = a_ref[...].astype(jnp.bfloat16)    # int8 edge counts -> bf16 (exact)

    agg = jnp.dot(a, x_in, preferred_element_type=jnp.float32)
    agg = (agg * invd_ref[...]).astype(jnp.bfloat16)   # exact 1/deg row scaling

    pre = (jnp.dot(agg, wl_ref[0], preferred_element_type=jnp.float32)
           + jnp.dot(x_in, wr_ref[0], preferred_element_type=jnp.float32)
           + b_ref[0])
    h_new = jnp.maximum(pre, 0.0)

    h_ref[1 - cur] = h_new.astype(h_ref.dtype)          # feed next layer
    out_ref[...] = h_new.astype(out_ref.dtype)          # last layer wins


def _fused_forward(a_i8, inv_deg, x0, wl, wr, b, *, vmem_limit):
    n_pad, d = x0.shape
    n_layers = wl.shape[0]

    flops = n_layers * (2 * n_pad * n_pad * d + 4 * n_pad * d * d)
    bytes_accessed = (a_i8.size + inv_deg.size * 4 + x0.size * 2
                      + (wl.size + wr.size) * 2 + b.size * 4 + n_pad * d * 2)

    return pl.pallas_call(
        _fused_kernel,
        out_shape=jax.ShapeDtypeStruct((n_pad, d), jnp.bfloat16),
        grid_spec=pltpu.PrefetchScalarGridSpec(
            num_scalar_prefetch=0,
            grid=(n_layers,),
            in_specs=[
                pl.BlockSpec((n_pad, n_pad), lambda l: (0, 0)),  # A (read once)
                pl.BlockSpec((n_pad, 1), lambda l: (0, 0)),      # 1/deg
                pl.BlockSpec((n_pad, d), lambda l: (0, 0)),      # X0
                pl.BlockSpec((1, d, d), lambda l: (l, 0, 0)),    # W_l[layer]
                pl.BlockSpec((1, d, d), lambda l: (l, 0, 0)),    # W_r[layer]
                pl.BlockSpec((1, 1, d), lambda l: (l, 0, 0)),    # bias[layer]
            ],
            out_specs=pl.BlockSpec((n_pad, d), lambda l: (0, 0)),
            scratch_shapes=[pltpu.VMEM((2, n_pad, d), jnp.bfloat16)],
        ),
        compiler_params=pltpu.CompilerParams(
            dimension_semantics=("arbitrary",),
            vmem_limit_bytes=vmem_limit),
        cost_estimate=pl.CostEstimate(
            flops=int(flops), transcendentals=0,
            bytes_accessed=int(bytes_accessed)),
    )(a_i8, inv_deg, x0, wl, wr, b)


# ---------------------------------------------------------------------------
# Tiled path: one pallas_call per layer, A streamed in (tm, tk) int8 tiles.
# ---------------------------------------------------------------------------
def _tiled_layer_kernel(a_ref, invd_ref, xk_ref, xr_ref, wl_ref, wr_ref, b_ref,
                        out_ref, acc_ref, root_ref, *, x_resident, tk):
    k = pl.program_id(1)

    @pl.when(k == 0)
    def _():
        acc_ref[...] = jnp.zeros_like(acc_ref)
        # Root-branch projection once per row tile, hidden under the A stream
        # so the final-k epilogue only does agg @ W_l + add + ReLU.
        root_ref[...] = (jnp.dot(xr_ref[...], wr_ref[...],
                                 preferred_element_type=jnp.float32)
                         + b_ref[...])

    a = a_ref[...].astype(jnp.bfloat16)     # int8 counts -> bf16 (exact)
    if x_resident:
        start = pl.multiple_of(k * tk, tk)
        xk = xk_ref[pl.ds(start, tk), :]    # slice the VMEM-resident X
    else:
        xk = xk_ref[...]                    # streamed (tk, d_in) block
    acc_ref[...] += jnp.dot(a, xk, preferred_element_type=jnp.float32)

    @pl.when(k == pl.num_programs(1) - 1)
    def _():
        agg = (acc_ref[...] * invd_ref[...]).astype(jnp.bfloat16)
        h = (jnp.dot(agg, wl_ref[...], preferred_element_type=jnp.float32)
             + root_ref[...])
        out_ref[...] = jnp.maximum(h, 0.0).astype(out_ref.dtype)


def _tiled_layer(a_i8, inv_deg, x, wl, wr, b, *, tm, tk, vmem_limit,
                 stream_x=None):
    n_pad = a_i8.shape[0]
    d_in = x.shape[1]
    d_out = wl.shape[1]
    grid = (n_pad // tm, n_pad // tk)

    # Keep the whole X operand resident in VMEM when it fits (DMA'd once
    # instead of once per row tile); otherwise stream (tk, d_in) blocks.
    if stream_x is None:
        stream_x = (4 * n_pad * d_in * 2) > vmem_limit // 3
    x_resident = not stream_x
    if x_resident:
        xk_spec = pl.BlockSpec((n_pad, d_in), lambda i, k: (0, 0))
        xk_bytes = n_pad * d_in * 2
    else:
        xk_spec = pl.BlockSpec((tk, d_in), lambda i, k: (k, 0))
        xk_bytes = grid[0] * n_pad * d_in * 2

    # Triple-buffer the dominant A stream to smooth DMA jitter (falls back
    # cleanly if this jax version does not expose pipeline_mode).
    try:
        a_spec = pl.BlockSpec((tm, tk), lambda i, k: (i, k),
                              pipeline_mode=pl.Buffered(3))
    except Exception:
        a_spec = pl.BlockSpec((tm, tk), lambda i, k: (i, k))

    flops = 2 * n_pad * n_pad * d_in + 4 * n_pad * d_in * d_out
    bytes_accessed = (a_i8.size + n_pad * 4 + xk_bytes + n_pad * d_in * 2
                      + (wl.size + wr.size) * 2 + b.size * 4
                      + n_pad * d_out * 2)

    kernel = functools.partial(_tiled_layer_kernel,
                               x_resident=x_resident, tk=tk)

    return pl.pallas_call(
        kernel,
        out_shape=jax.ShapeDtypeStruct((n_pad, d_out), jnp.bfloat16),
        grid_spec=pltpu.PrefetchScalarGridSpec(
            num_scalar_prefetch=0,
            grid=grid,
            in_specs=[
                a_spec,                                            # A tile
                pl.BlockSpec((tm, 1), lambda i, k: (i, 0)),        # 1/deg rows
                xk_spec,                                           # X (agg)
                pl.BlockSpec((tm, d_in), lambda i, k: (i, 0)),     # X (root)
                pl.BlockSpec((d_in, d_out), lambda i, k: (0, 0)),  # W_l
                pl.BlockSpec((d_in, d_out), lambda i, k: (0, 0)),  # W_r
                pl.BlockSpec((1, d_out), lambda i, k: (0, 0)),     # bias
            ],
            out_specs=pl.BlockSpec((tm, d_out), lambda i, k: (i, 0)),
            scratch_shapes=[pltpu.VMEM((tm, d_in), jnp.float32),   # agg acc
                            pltpu.VMEM((tm, d_out), jnp.float32)], # root
        ),
        compiler_params=pltpu.CompilerParams(
            dimension_semantics=("parallel", "arbitrary"),
            vmem_limit_bytes=vmem_limit),
        cost_estimate=pl.CostEstimate(
            flops=int(flops), transcendentals=0,
            bytes_accessed=int(bytes_accessed)),
    )(a_i8, inv_deg, x, x, wl, wr, b)


# ---------------------------------------------------------------------------
# Encoder wrapper
# ---------------------------------------------------------------------------
def graphsage_encoder(adj_counts, x, params, *, tm=256, tk=512,
                      force_tiled=False, stream_x=None):
    """adj_counts[i, j] = #edges j -> i (float counts); x: (N, F_in) features."""
    n, f_in = x.shape
    hidden = params["w1_l"].shape[1]
    n_layers = 3

    deg = adj_counts.sum(axis=1, keepdims=True)
    inv_deg = 1.0 / jnp.maximum(deg, 1.0)             # exact f32 normalization

    f_in_pad = _round_up(f_in, 128)
    h_pad = _round_up(hidden, 128)
    vmem_limit = _vmem_limit_bytes()

    # ---- fused path sizing: A + activations resident for all 3 layers ----
    d = max(f_in_pad, h_pad)
    n_pad_f = _round_up(max(n, 8), 128)
    fused_bytes = (2 * n_pad_f * n_pad_f            # int8 A, double-buffered
                   + 2 * n_pad_f * n_pad_f * 2      # in-kernel bf16 cast slack
                   + 8 * n_pad_f * d * 2            # x0/out buffers + h scratch
                   + 2 * n_pad_f * d * 4            # f32 matmul temporaries
                   + 8 * d * d * 2)                 # weight blocks
    use_fused = (not force_tiled) and fused_bytes <= (vmem_limit * 3) // 4

    if use_fused:
        n_pad = n_pad_f
        # NOTE: assumes edge multiplicity <= 127 (int8 edge counts).
        a_p = jnp.zeros((n_pad, n_pad), jnp.int8).at[:n, :n].set(
            adj_counts.astype(jnp.int8))
        inv_p = jnp.ones((n_pad, 1), jnp.float32).at[:n].set(inv_deg)
        x_p = jnp.zeros((n_pad, d), jnp.bfloat16).at[:n, :f_in].set(
            x.astype(jnp.bfloat16))
        wl = jnp.zeros((n_layers, d, d), jnp.bfloat16)
        wr = jnp.zeros((n_layers, d, d), jnp.bfloat16)
        b = jnp.zeros((n_layers, 1, d), jnp.float32)
        for i, layer in enumerate((1, 2, 3)):
            wli, wri = params[f"w{layer}_l"], params[f"w{layer}_r"]
            bi = params[f"b{layer}"]
            wl = wl.at[i, :wli.shape[0], :wli.shape[1]].set(
                wli.astype(jnp.bfloat16))
            wr = wr.at[i, :wri.shape[0], :wri.shape[1]].set(
                wri.astype(jnp.bfloat16))
            b = b.at[i, :, :bi.shape[1]].set(bi)
        out = _fused_forward(a_p, inv_p, x_p, wl, wr, b, vmem_limit=vmem_limit)
        return out[:n, :hidden].astype(jnp.float32)

    # ---- tiled fallback: per-layer pallas_call streaming int8 A tiles ----
    n_pad0 = _round_up(max(n, 8), 128)
    tm = min(tm, n_pad0)
    tk = min(tk, n_pad0)
    n_pad = _round_up(n_pad0, math.lcm(tm, tk))

    a_p = jnp.zeros((n_pad, n_pad), jnp.int8).at[:n, :n].set(
        adj_counts.astype(jnp.int8))
    inv_p = jnp.ones((n_pad, 1), jnp.float32).at[:n].set(inv_deg)
    h = jnp.zeros((n_pad, f_in_pad), jnp.bfloat16).at[:n, :f_in].set(
        x.astype(jnp.bfloat16))

    for layer in (1, 2, 3):
        wli, wri = params[f"w{layer}_l"], params[f"w{layer}_r"]
        bi = params[f"b{layer}"]
        d_in = h.shape[1]
        wl_p = jnp.zeros((d_in, h_pad), jnp.bfloat16).at[
            :wli.shape[0], :wli.shape[1]].set(wli.astype(jnp.bfloat16))
        wr_p = jnp.zeros((d_in, h_pad), jnp.bfloat16).at[
            :wri.shape[0], :wri.shape[1]].set(wri.astype(jnp.bfloat16))
        b_p = jnp.zeros((1, h_pad), jnp.float32).at[:, :bi.shape[1]].set(bi)
        h = _tiled_layer(a_p, inv_p, h, wl_p, wr_p, b_p, tm=tm, tk=tk,
                         vmem_limit=vmem_limit, stream_x=stream_x)

    return h[:n, :hidden].astype(jnp.float32)


# ---------------------------------------------------------------------------
# Graph / parameter construction and reference
# ---------------------------------------------------------------------------
def build_adjacency(edge_index, num_nodes):
    """Dense edge-count adjacency C[i, j] = #edges j -> i (mean-agg numerator)."""
    # TODO(synk): for large sparse graphs replace the dense O(N^2) adjacency
    # with a CSR gather kernel (scalar-prefetched row offsets / column indices).
    src, dst = edge_index[0], edge_index[1]
    return jnp.zeros((num_nodes, num_nodes), jnp.float32).at[dst, src].add(1.0)


def init_params(key, in_channels, hidden_channels):
    """Deterministic init matching SAGEConv parameter shapes.

    Each SAGEConv has lin_l (with bias) on the aggregated neighbors and lin_r
    (no bias) on the root features.  Weights stored (F_in, F_out).
    """
    dims = [(in_channels, hidden_channels),
            (hidden_channels, hidden_channels),
            (hidden_channels, hidden_channels)]
    params = {}
    keys = jax.random.split(key, 6)
    for layer, (fi, fo) in enumerate(dims, start=1):
        scale = 1.0 / jnp.sqrt(jnp.float32(fi))
        kl, kr = keys[2 * (layer - 1)], keys[2 * (layer - 1) + 1]
        params[f"w{layer}_l"] = jax.random.uniform(
            kl, (fi, fo), jnp.float32, -scale, scale)
        params[f"w{layer}_r"] = jax.random.uniform(
            kr, (fi, fo), jnp.float32, -scale, scale)
        params[f"b{layer}"] = jnp.zeros((1, fo), jnp.float32)
    return params


def reference_forward(adj_counts, x, params):
    """Pure-JAX reference mirroring the kernels' bf16-input / f32-accum math."""
    deg = adj_counts.sum(axis=1, keepdims=True)
    inv_deg = 1.0 / jnp.maximum(deg, 1.0)
    a = adj_counts.astype(jnp.bfloat16)          # small integer counts: exact
    h = x.astype(jnp.bfloat16)
    for layer in (1, 2, 3):
        agg = (jnp.dot(a, h, preferred_element_type=jnp.float32)
               * inv_deg).astype(jnp.bfloat16)
        pre = (jnp.dot(agg, params[f"w{layer}_l"].astype(jnp.bfloat16),
                       preferred_element_type=jnp.float32)
               + jnp.dot(h, params[f"w{layer}_r"].astype(jnp.bfloat16),
                         preferred_element_type=jnp.float32)
               + params[f"b{layer}"])
        h = jnp.maximum(pre, 0.0).astype(jnp.bfloat16)
    return h.astype(jnp.float32)


if __name__ == "__main__":
    key = jax.random.PRNGKey(0)
    k_feat, k_edge, k_param = jax.random.split(key, 3)

    num_nodes = 300
    in_channels = 16
    hidden_channels = 32
    num_edges = 1200

    x = jax.random.normal(k_feat, (num_nodes, in_channels), jnp.float32)
    edge_index = jax.random.randint(
        k_edge, (2, num_edges), 0, num_nodes, dtype=jnp.int32)

    adj = build_adjacency(edge_index, num_nodes)
    params = init_params(k_param, in_channels, hidden_channels)
    ref = reference_forward(adj, x, params)

    # Fused path: adjacency resident in VMEM, read from HBM once for 3 layers.
    out_fused = jax.block_until_ready(graphsage_encoder(adj, x, params))
    # Tiled large-graph fallback, with VMEM-resident X and with streamed X.
    out_tiled = jax.block_until_ready(
        graphsage_encoder(adj, x, params, force_tiled=True))
    out_stream = jax.block_until_ready(
        graphsage_encoder(adj, x, params, force_tiled=True, stream_x=True))

    for out in (out_fused, out_tiled, out_stream):
        assert out.shape == (num_nodes, hidden_channels)
        max_err = float(jnp.max(jnp.abs(out - ref)))
        assert jnp.allclose(out, ref, atol=5e-2, rtol=5e-2), max_err

    print("KERNEL_OK")
</pallas_src>

<mosaic_0001>
module attributes {stable_mosaic.version = 11 : i64} {
  func.func @_fused_kernel(%arg0: i32, %arg1: memref<384x384xi8, #tpu.memory_space<vmem>>, %arg2: memref<384x1xf32, #tpu.memory_space<vmem>>, %arg3: memref<384x128xbf16, #tpu.memory_space<vmem>>, %arg4: memref<1x128x128xbf16, #tpu.memory_space<vmem>>, %arg5: memref<1x128x128xbf16, #tpu.memory_space<vmem>>, %arg6: memref<1x1x128xf32, #tpu.memory_space<vmem>>, %arg7: memref<384x128xbf16, #tpu.memory_space<vmem>>, %arg8: memref<2x384x128xbf16, #tpu.memory_space<vmem>>) attributes {dimension_semantics = [#tpu.dimension_semantics<arbitrary>], iteration_bounds = array<i64: 3>, scalar_prefetch = 0 : i64, scratch_operands = 1 : i64, tpu.core_type = #tpu.core_type<tc>, window_params = [{pipeline_mode = #tpu.pipeline_mode<synchronous>, transform_indices = @transform_0, window_bounds = array<i64: 384, 384>}, {pipeline_mode = #tpu.pipeline_mode<synchronous>, transform_indices = @transform_1, window_bounds = array<i64: 384, 1>}, {pipeline_mode = #tpu.pipeline_mode<synchronous>, transform_indices = @transform_2, window_bounds = array<i64: 384, 128>}, {transform_indices = @transform_3, window_bounds = array<i64: 1, 128, 128>}, {transform_indices = @transform_4, window_bounds = array<i64: 1, 128, 128>}, {transform_indices = @transform_5, window_bounds = array<i64: 1, 1, 128>}, {pipeline_mode = #tpu.pipeline_mode<synchronous>, transform_indices = @transform_6, window_bounds = array<i64: 384, 128>}]} {
    %c0_i32 = arith.constant 0 : i32
    %0 = arith.cmpi eq, %arg0, %c0_i32 : i32
    %1 = arith.extui %0 : i1 to i32
    %c0_i32_0 = arith.constant 0 : i32
    %2 = arith.cmpi ne, %1, %c0_i32_0 : i32
    scf.if %2 {
      %c0_27 = arith.constant 0 : index
      %c0_28 = arith.constant 0 : index
      %44 = vector.load %arg3[%c0_27, %c0_28] : memref<384x128xbf16, #tpu.memory_space<vmem>>, vector<384x128xbf16>
      %c0_29 = arith.constant 0 : index
      %c0_30 = arith.constant 0 : index
      %c0_31 = arith.constant 0 : index
      %45 = vector.load %arg8[%c0_29, %c0_30, %c0_31] : memref<2x384x128xbf16, #tpu.memory_space<vmem>>, vector<1x384x128xbf16>
      %46 = vector.shape_cast %45 : vector<1x384x128xbf16> to vector<384x128xbf16>
      %47 = vector.shape_cast %44 : vector<384x128xbf16> to vector<1x384x128xbf16>
      tpu.vector_store %arg8[%c0_29, %c0_30, %c0_31], %47 {strides = array<i32>} : memref<2x384x128xbf16, #tpu.memory_space<vmem>>, vector<1x384x128xbf16>,
    } else {
    }
    %c2_i32 = arith.constant 2 : i32
    %c0_i32_1 = arith.constant 0 : i32
    %3 = arith.cmpi eq, %c2_i32, %c0_i32_1 : i32
    %c1_i32 = arith.constant 1 : i32
    %4 = arith.select %3, %c1_i32, %c2_i32 : i32
    %5 = arith.remsi %arg0, %4 : i32
    %c0_i32_2 = arith.constant 0 : i32
    %6 = arith.cmpi ne, %5, %c0_i32_2 : i32
    %c0_i32_3 = arith.constant 0 : i32
    %7 = arith.cmpi slt, %5, %c0_i32_3 : i32
    %c0_i32_4 = arith.constant 0 : i32
    %8 = arith.cmpi slt, %4, %c0_i32_4 : i32
    %9 = arith.xori %7, %8 : i1
    %10 = arith.andi %9, %6 : i1
    %11 = arith.addi %5, %4 : i32
    %12 = arith.select %10, %11, %5 : i32
    %13 = arith.index_cast %12 : i32 to index
    %c0 = arith.constant 0 : index
    %c0_5 = arith.constant 0 : index
    %14 = vector.load %arg8[%13, %c0, %c0_5] : memref<2x384x128xbf16, #tpu.memory_space<vmem>>, vector<1x384x128xbf16>
    %15 = vector.shape_cast %14 : vector<1x384x128xbf16> to vector<384x128xbf16>
    %c0_6 = arith.constant 0 : index
    %c0_7 = arith.constant 0 : index
    %16 = vector.load %arg1[%c0_6, %c0_7] : memref<384x384xi8, #tpu.memory_space<vmem>>, vector<384x384xi8>
    %17 = arith.sitofp %16 : vector<384x384xi8> to vector<384x384xbf16>
    %cst = arith.constant dense<0.000000e+00> : vector<384x128xf32>
    %18 = tpu.matmul %17, %15, %cst {dimension_numbers = #tpu.dot_dimension_numbers<[1], [0], [0], [1], [0, 0, 1, 1], [], []>} : vector<384x384xbf16>, vector<384x128xbf16>, vector<384x128xf32> -> vector<384x128xf32>
    %c0_8 = arith.constant 0 : index
    %c0_9 = arith.constant 0 : index
    %19 = vector.load %arg2[%c0_8, %c0_9] : memref<384x1xf32, #tpu.memory_space<vmem>>, vector<384x1xf32>
    %20 = vector.broadcast %19 : vector<384x1xf32> to vector<384x128xf32>
    %21 = arith.mulf %18, %20 : vector<384x128xf32>
    %22 = arith.truncf %21 : vector<384x128xf32> to vector<384x128xbf16>
    %c0_10 = arith.constant 0 : index
    %c0_11 = arith.constant 0 : index
    %c0_12 = arith.constant 0 : index
    %23 = vector.load %arg4[%c0_10, %c0_11, %c0_12] : memref<1x128x128xbf16, #tpu.memory_space<vmem>>, vector<1x128x128xbf16>
    %24 = vector.shape_cast %23 : vector<1x128x128xbf16> to vector<128x128xbf16>
    %cst_13 = arith.constant dense<0.000000e+00> : vector<384x128xf32>
    %25 = tpu.matmul %22, %24, %cst_13 {dimension_numbers = #tpu.dot_dimension_numbers<[1], [0], [0], [1], [0, 0, 1, 1], [], []>} : vector<384x128xbf16>, vector<128x128xbf16>, vector<384x128xf32> -> vector<384x128xf32>
    %c0_14 = arith.constant 0 : index
    %c0_15 = arith.constant 0 : index
    %c0_16 = arith.constant 0 : index
    %26 = vector.load %arg5[%c0_14, %c0_15, %c0_16] : memref<1x128x128xbf16, #tpu.memory_space<vmem>>, vector<1x128x128xbf16>
    %27 = vector.shape_cast %26 : vector<1x128x128xbf16> to vector<128x128xbf16>
    %cst_17 = arith.constant dense<0.000000e+00> : vector<384x128xf32>
    %28 = tpu.matmul %15, %27, %cst_17 {dimension_numbers = #tpu.dot_dimension_numbers<[1], [0], [0], [1], [0, 0, 1, 1], [], []>} : vector<384x128xbf16>, vector<128x128xbf16>, vector<384x128xf32> -> vector<384x128xf32>
    %29 = arith.addf %25, %28 : vector<384x128xf32>
    %c0_18 = arith.constant 0 : index
    %c0_19 = arith.constant 0 : index
    %c0_20 = arith.constant 0 : index
    %30 = vector.load %arg6[%c0_18, %c0_19, %c0_20] : memref<1x1x128xf32, #tpu.memory_space<vmem>>, vector<1x1x128xf32>
    %31 = vector.shape_cast %30 : vector<1x1x128xf32> to vector<1x128xf32>
    %32 = vector.broadcast %31 : vector<1x128xf32> to vector<384x128xf32>
    %33 = arith.addf %29, %32 : vector<384x128xf32>
    %cst_21 = arith.constant 0.000000e+00 : f32
    %34 = vector.broadcast %cst_21 : f32 to vector<384x128xf32>
    %35 = arith.maximumf %33, %34 : vector<384x128xf32>
    %36 = arith.truncf %35 : vector<384x128xf32> to vector<384x128xbf16>
    %c1_i32_22 = arith.constant 1 : i32
    %37 = arith.subi %c1_i32_22, %12 : i32
    %38 = arith.index_cast %37 : i32 to index
    %c0_23 = arith.constant 0 : index
    %c0_24 = arith.constant 0 : index
    %39 = vector.load %arg8[%38, %c0_23, %c0_24] : memref<2x384x128xbf16, #tpu.memory_space<vmem>>, vector<1x384x128xbf16>
    %40 = vector.shape_cast %39 : vector<1x384x128xbf16> to vector<384x128xbf16>
    %41 = vector.shape_cast %36 : vector<384x128xbf16> to vector<1x384x128xbf16>
    tpu.vector_store %arg8[%38, %c0_23, %c0_24], %41 {strides = array<i32>} : memref<2x384x128xbf16, #tpu.memory_space<vmem>>, vector<1x384x128xbf16>,
    %42 = arith.truncf %35 : vector<384x128xf32> to vector<384x128xbf16>
    %c0_25 = arith.constant 0 : index
    %c0_26 = arith.constant 0 : index
    %43 = vector.load %arg7[%c0_25, %c0_26] : memref<384x128xbf16, #tpu.memory_space<vmem>>, vector<384x128xbf16>
    tpu.vector_store %arg7[%c0_25, %c0_26], %42 {strides = array<i32>} : memref<384x128xbf16, #tpu.memory_space<vmem>>, vector<384x128xbf16>,
    return
  }
  func.func @transform_0(%arg0: i32) -> (i32, i32) {
    %c0_i32 = arith.constant 0 : i32
    %c0_i32_0 = arith.constant 0 : i32
    %c0_i32_1 = arith.constant 0 : i32
    return %c0_i32, %c0_i32_0 : i32, i32
  }
  func.func @transform_1(%arg0: i32) -> (i32, i32) {
    %c0_i32 = arith.constant 0 : i32
    %c0_i32_0 = arith.constant 0 : i32
    %c0_i32_1 = arith.constant 0 : i32
    return %c0_i32, %c0_i32_0 : i32, i32
  }
  func.func @transform_2(%arg0: i32) -> (i32, i32) {
    %c0_i32 = arith.constant 0 : i32
    %c0_i32_0 = arith.constant 0 : i32
    %c0_i32_1 = arith.constant 0 : i32
    return %c0_i32, %c0_i32_0 : i32, i32
  }
  func.func @transform_3(%arg0: i32) -> (i32, i32, i32) {
    %c0_i32 = arith.constant 0 : i32
    %c0_i32_0 = arith.constant 0 : i32
    %c0_i32_1 = arith.constant 0 : i32
    return %arg0, %c0_i32, %c0_i32_0 : i32, i32, i32
  }
  func.func @transform_4(%arg0: i32) -> (i32, i32, i32) {
    %c0_i32 = arith.constant 0 : i32
    %c0_i32_0 = arith.constant 0 : i32
    %c0_i32_1 = arith.constant 0 : i32
    return %arg0, %c0_i32, %c0_i32_0 : i32, i32, i32
  }
  func.func @transform_5(%arg0: i32) -> (i32, i32, i32) {
    %c0_i32 = arith.constant 0 : i32
    %c0_i32_0 = arith.constant 0 : i32
    %c0_i32_1 = arith.constant 0 : i32
    return %arg0, %c0_i32, %c0_i32_0 : i32, i32, i32
  }
  func.func @transform_6(%arg0: i32) -> (i32, i32) {
    %c0_i32 = arith.constant 0 : i32
    %c0_i32_0 = arith.constant 0 : i32
    %c0_i32_1 = arith.constant 0 : i32
    return %c0_i32, %c0_i32_0 : i32, i32
  }
}

</mosaic_0001>

<llo_original>
// kernel: tpu_custom_call.1
$region0: #{tpu_custom_call.1}
  #allocation0 [shape = 'u32[]', space=smem, size = 0x4, offset = 0x4, fixed_abs, tag = 'smem constant byte address 0x4 - core index']
  #allocation1 [shape = 'u32[72,128]{1,0:T(1,128)}', space=vmem, size = 0x9000, scoped, tag = 'internal scratch']
  #allocation2 [shape = 'bf16[2,384,128]{2,1,0:T(8,128)(2,1)}', space=vmem, size = 0x30000, scoped, tag = 'scratch operand']
  %s0 = inlined_call_operand.vmem [shape: s8[384,384], index: 0, kind: input, shape index: {}]
  %s1 = inlined_call_operand.vmem [shape: f32[384,1], index: 1, kind: input, shape index: {}]
  %s2 = inlined_call_operand.hbm [shape: bf16[384,128], index: 2, kind: input, shape index: {}]
  %s3 = inlined_call_operand.hbm [shape: bf16[3,128,128], index: 3, kind: input, shape index: {}]
  %s4 = inlined_call_operand.hbm [shape: bf16[3,128,128], index: 4, kind: input, shape index: {}]
  %s5 = inlined_call_operand.vmem [shape: f32[3,1,128], index: 5, kind: input, shape index: {}]
  %s6 = inlined_call_operand.hbm [shape: bf16[384,128], index: 6, kind: output, shape index: {}]
  %s7 = sld [smem:[#allocation0]]
  $region73: #{tpu_custom_call.1} parent=0
    _
  %s9 = ssub.s32 1, %s7
  %s10 = scalar_select 0, %s9, %s7
  $region1: #{tpu_custom_call.1} parent=0
    #allocation3 [shape = 'u8[98304]{0}', space=vmem, size = 0x18000, scoped, tag = 'input window, operand 2, single buffered']
    #allocation4 [shape = 's32[2]{0}', space=sflag, size = 0x8, scoped, tag = 'scoped memory for tpu_custom_call.1']
    #allocation5 [shape = 's32[2]{0}', space=sflag, size = 0x8, scoped, tag = 'scoped memory for tpu_custom_call.1']
    #allocation6 [shape = 'u8[65536]{0}', space=vmem, size = 0x10000, scoped, tag = 'input window, operand 3']
    #allocation7 [shape = 's32[2]{0}', space=sflag, size = 0x8, scoped, tag = 'scoped memory for tpu_custom_call.1']
    #allocation8 [shape = 'u8[65536]{0}', space=vmem, size = 0x10000, scoped, tag = 'input window, operand 4']
    #allocation9 [shape = 'u8[98304]{0}', space=vmem, size = 0x18000, scoped, tag = 'output window, operand 0, single buffered']
    %11 = vsyncpa [#allocation4], 0
    %12 = vsyncpa [#allocation7], 0
    %s13 = scalar_lea.sflag [#allocation7], 1
    %14 = vsyncpa %s13, 0
    %15 = vsyncpa [#allocation5], 0
    loop: start=0, step=1, limit=5
    $region2: #{tpu_custom_call.1} parent=1 // loop_pre_header
      _
    $region3: #{tpu_custom_call.1} parent=1 // loop_header
      %s17 = sphi 0, %s21
      %p18 = scmp.ge.s32.totalorder %s17, 5
      %s25 = sphi 0, %s25
      %s27 = sphi 0, %s25
      %s28 = sphi 0, %s27
      %s42 = sphi 0, %s28
      %s46 = sphi 0, %s46
      %s48 = sphi 0, %s46
      %s49 = sphi 0, %s48
      %s63 = sphi 0, %s49
      %s67 = sphi 0, %s67
      %s69 = sphi 0, %s67
      %s70 = sphi 0, %s69
      %s84 = sphi 0, %s70
      %s90 = sphi 0, %s92
      %s93 = sphi 0, %s90
      %s94 = sphi 0, %s93
      %s110 = sphi 0, %s94
      %s116 = sphi 0, %s118
      %s119 = sphi 0, %s116
      %s120 = sphi 0, %s119
      %s136 = sphi 0, %s120
      %s142 = sphi 0, %s144
      %s145 = sphi 0, %s142
      %s146 = sphi 0, %s145
      %s162 = sphi 0, %s146
      %s166 = sphi 0, %s166
      %s168 = sphi 0, %s166
      %s169 = sphi 0, %s168
      %s183 = sphi 0, %s169
    $region4: #{tpu_custom_call.1} parent=1 // loop_header_branch
      %20 = sbr.rel (%p18) target = $region8
    $region5: #{tpu_custom_call.1} parent=1 // loop_body
      %s22 = ssub.s32 %s17, 1
      %s23 = ssub.s32 %s17, 2
      %s24 = sadd.s32 %s17, 1
      %s26 = sadd.s32 %s25, 1
      %p29 = scmp.eq.s32.totalorder %s17, 2
      %p30 = scmp.ne.s32.totalorder %s25, %s27
      %p31 = scmp.eq.s32.totalorder %s17, 0
      %p32 = por %p30, %p31
      %p33 = scmp.ne.s32.totalorder %s25, %s27
      %p34 = scmp.eq.s32.totalorder %s22, 2
      %p35 = por %p33, %p34
      %p36 = scmp.ne.s32.totalorder %s27, %s28
      %p37 = scmp.eq.s32.totalorder %s22, 0
      %p38 = por %p36, %p37
      %p39 = scmp.ne.s32.totalorder %s27, %s28
      %p40 = scmp.eq.s32.totalorder %s23, 2
      %p41 = por %p39, %p40
      %p43 = scmp.ne.s32.totalorder %s28, %s42
      %p44 = scmp.eq.s32.totalorder %s23, 0
      %p45 = por %p43, %p44
      %s47 = sadd.s32 %s46, 1
      %p50 = scmp.eq.s32.totalorder %s17, 2
      %p51 = scmp.ne.s32.totalorder %s46, %s48
      %p52 = scmp.eq.s32.totalorder %s17, 0
      %p53 = por %p51, %p52
      %p54 = scmp.ne.s32.totalorder %s46, %s48
      %p55 = scmp.eq.s32.totalorder %s22, 2
      %p56 = por %p54, %p55
      %p57 = scmp.ne.s32.totalorder %s48, %s49
      %p58 = scmp.eq.s32.totalorder %s22, 0
      %p59 = por %p57, %p58
      %p60 = scmp.ne.s32.totalorder %s48, %s49
      %p61 = scmp.eq.s32.totalorder %s23, 2
      %p62 = por %p60, %p61
      %p64 = scmp.ne.s32.totalorder %s49, %s63
      %p65 = scmp.eq.s32.totalorder %s23, 0
      %p66 = por %p64, %p65
      %s68 = sadd.s32 %s67, 1
      %p71 = scmp.eq.s32.totalorder %s17, 2
      %p72 = scmp.ne.s32.totalorder %s67, %s69
      %p73 = scmp.eq.s32.totalorder %s17, 0
      %p74 = por %p72, %p73
      %p75 = scmp.ne.s32.totalorder %s67, %s69
      %p76 = scmp.eq.s32.totalorder %s22, 2
      %p77 = por %p75, %p76
      %p78 = scmp.ne.s32.totalorder %s69, %s70
      %p79 = scmp.eq.s32.totalorder %s22, 0
      %p80 = por %p78, %p79
      %p81 = scmp.ne.s32.totalorder %s69, %s70
      %p82 = scmp.eq.s32.totalorder %s23, 2
      %p83 = por %p81, %p82
      %p85 = scmp.ne.s32.totalorder %s70, %s84
      %p86 = scmp.eq.s32.totalorder %s23, 0
      %p87 = por %p85, %p86
      %s88 = ssub.s32 %s17, %s24
      %p89 = scmp.eq.s32.totalorder %s88, 0
      %s91 = sadd.s32 %s90, 1
      %s92 = scalar_select %p89, %s90, %s91
      %p95 = pneg %p89
      %p96 = scmp.eq.s32.totalorder %s17, 2
      %p97 = por %p95, %p96
      %p98 = scmp.ne.s32.totalorder %s90, %s93
      %p99 = scmp.eq.s32.totalorder %s17, 0
      %p100 = por %p98, %p99
      %p101 = scmp.ne.s32.totalorder %s90, %s93
      %p102 = scmp.eq.s32.totalorder %s22, 2
      %p103 = por %p101, %p102
      %p104 = scmp.ne.s32.totalorder %s93, %s94
      %p105 = scmp.eq.s32.totalorder %s22, 0
      %p106 = por %p104, %p105
      %p107 = scmp.ne.s32.totalorder %s93, %s94
      %p108 = scmp.eq.s32.totalorder %s23, 2
      %p109 = por %p107, %p108
      %p111 = scmp.ne.s32.totalorder %s94, %s110
      %p112 = scmp.eq.s32.totalorder %s23, 0
      %p113 = por %p111, %p112
      %s114 = ssub.s32 %s17, %s24
      %p115 = scmp.eq.s32.totalorder %s114, 0
      %s117 = sadd.s32 %s116, 1
      %s118 = scalar_select %p115, %s116, %s117
      %p121 = pneg %p115
      %p122 = scmp.eq.s32.totalorder %s17, 2
      %p123 = por %p121, %p122
      %p124 = scmp.ne.s32.totalorder %s116, %s119
      %p125 = scmp.eq.s32.totalorder %s17, 0
      %p126 = por %p124, %p125
      %p127 = scmp.ne.s32.totalorder %s116, %s119
      %p128 = scmp.eq.s32.totalorder %s22, 2
      %p129 = por %p127, %p128
      %p130 = scmp.ne.s32.totalorder %s119, %s120
      %p131 = scmp.eq.s32.totalorder %s22, 0
      %p132 = por %p130, %p131
      %p133 = scmp.ne.s32.totalorder %s119, %s120
      %p134 = scmp.eq.s32.totalorder %s23, 2
      %p135 = por %p133, %p134
      %p137 = scmp.ne.s32.totalorder %s120, %s136
      %p138 = scmp.eq.s32.totalorder %s23, 0
      %p139 = por %p137, %p138
      %s140 = ssub.s32 %s17, %s24
      %p141 = scmp.eq.s32.totalorder %s140, 0
      %s143 = sadd.s32 %s142, 1
      %s144 = scalar_select %p141, %s142, %s143
      %p147 = pneg %p141
      %p148 = scmp.eq.s32.totalorder %s17, 2
      %p149 = por %p147, %p148
      %p150 = scmp.ne.s32.totalorder %s142, %s145
      %p151 = scmp.eq.s32.totalorder %s17, 0
      %p152 = por %p150, %p151
      %p153 = scmp.ne.s32.totalorder %s142, %s145
      %p154 = scmp.eq.s32.totalorder %s22, 2
      %p155 = por %p153, %p154
      %p156 = scmp.ne.s32.totalorder %s145, %s146
      %p157 = scmp.eq.s32.totalorder %s22, 0
      %p158 = por %p156, %p157
      %p159 = scmp.ne.s32.totalorder %s145, %s146
      %p160 = scmp.eq.s32.totalorder %s23, 2
      %p161 = por %p159, %p160
      %p163 = scmp.ne.s32.totalorder %s146, %s162
      %p164 = scmp.eq.s32.totalorder %s23, 0
      %p165 = por %p163, %p164
      %s167 = sadd.s32 %s166, 1
      %p170 = scmp.eq.s32.totalorder %s17, 2
      %p171 = scmp.ne.s32.totalorder %s166, %s168
      %p172 = scmp.eq.s32.totalorder %s17, 0
      %p173 = por %p171, %p172
      %p174 = scmp.ne.s32.totalorder %s166, %s168
      %p175 = scmp.eq.s32.totalorder %s22, 2
      %p176 = por %p174, %p175
      %p177 = scmp.ne.s32.totalorder %s168, %s169
      %p178 = scmp.eq.s32.totalorder %s22, 0
      %p179 = por %p177, %p178
      %p180 = scmp.ne.s32.totalorder %s168, %s169
      %p181 = scmp.eq.s32.totalorder %s23, 2
      %p182 = por %p180, %p181
      %p184 = scmp.ne.s32.totalorder %s169, %s183
      %p185 = scmp.eq.s32.totalorder %s23, 0
      %p186 = por %p184, %p185
      %p187 = scmp.le.s32.totalorder 1, %s17
      %p188 = scmp.lt.s32.totalorder %s17, 4
      %p189 = pnand %p187, %p188
      %p190 = pneg %p189
      // Predicated region
      $region9: #{tpu_custom_call.1} parent=5 // pred_check
        _
      $region10: #{tpu_custom_call.1} parent=5 // pred_check_branch
        %192 = sbr.rel (%p189) target = $region12
      $region11: #{tpu_custom_call.1} parent=5 // pred_region
        %s193 = ssub.s32 %s17, 1
        // Predicated region
        $region13: #{tpu_custom_call.1} parent=11 // pred_check
          %p194 = pneg %p38
        $region14: #{tpu_custom_call.1} parent=11 // pred_check_branch
          %196 = sbr.rel (%p194) target = $region16
        $region15: #{tpu_custom_call.1} parent=11 // pred_region
          _
        $region16: #{tpu_custom_call.1} parent=11 // pred_fallthru
          _
        // Predicated region
        $region17: #{tpu_custom_call.1} parent=11 // pred_check
          %p197 = pneg %p59
        $region18: #{tpu_custom_call.1} parent=11 // pred_check_branch
          %199 = sbr.rel (%p197) target = $region20
        $region19: #{tpu_custom_call.1} parent=11 // pred_region
          _
        $region20: #{tpu_custom_call.1} parent=11 // pred_fallthru
          _
        // Predicated region
        $region21: #{tpu_custom_call.1} parent=11 // pred_check
          %p200 = pneg %p80
        $region22: #{tpu_custom_call.1} parent=11 // pred_check_branch
          %202 = sbr.rel (%p200) target = $region24
        $region23: #{tpu_custom_call.1} parent=11 // pred_region
          %204 = vsyncadd [#allocation4], 0
          %s205 = sshll.u32 %s2, 4
          %s206 = int_to_ptr.hbm [resolvable:$true] %s205
          %s207 = sshll.u32 [#allocation3], 4
          %s208 = int_to_ptr.vmem [resolvable:$true] %s207
          %213 = dma.hbm_to_vmem [thread:$0]  %s206, 3072, %s208, [#allocation4], 64, 64, 4
        $region24: #{tpu_custom_call.1} parent=11 // pred_fallthru
          _
      $region12: #{tpu_custom_call.1} parent=5 // pred_fallthru
        _
      %p214 = scmp.lt.s32.totalorder %s17, 3
      // Predicated region
      $region25: #{tpu_custom_call.1} parent=5 // pred_check
        %p215 = pneg %p214
      $region26: #{tpu_custom_call.1} parent=5 // pred_check_branch
        %217 = sbr.rel (%p215) target = $region28
      $region27: #{tpu_custom_call.1} parent=5 // pred_region
        // Predicated region
        $region29: #{tpu_custom_call.1} parent=27 // pred_check
          %p218 = pneg %p100
        $region30: #{tpu_custom_call.1} parent=27 // pred_check_branch
          %220 = sbr.rel (%p218) target = $region32
        $region31: #{tpu_custom_call.1} parent=27 // pred_region
          %s221 = sand.u32 %s17, 1
          %s222 = scalar_lea.sflag [#allocation7], %s221
          %s223 = sand.u32 %s90, 1
          %s224 = smul.addr %s223, 64
          %s225 = scalar_lea.vmem [#allocation6], %s224
          %227 = vsyncadd %s222, 0
          %s228 = smul.addr %s17, 16
          %s229 = smul.addr %s228, 4
          %s230 = scalar_lea.hbm %s3, %s229
          %s231 = sshll.u32 %s230, 4
          %s232 = int_to_ptr.hbm [resolvable:$true] %s231
          %s233 = sshll.u32 %s225, 4
          %s234 = int_to_ptr.vmem [resolvable:$true] %s233
          %239 = dma.hbm_to_vmem [thread:$0]  %s232, 1024, %s234, %s222, 64, 64, 4
        $region32: #{tpu_custom_call.1} parent=27 // pred_fallthru
          _
        // Predicated region
        $region33: #{tpu_custom_call.1} parent=27 // pred_check
          %p240 = pneg %p126
        $region34: #{tpu_custom_call.1} parent=27 // pred_check_branch
          %242 = sbr.rel (%p240) target = $region36
        $region35: #{tpu_custom_call.1} parent=27 // pred_region
          %s243 = sand.u32 %s17, 1
          %s244 = scalar_lea.sflag [#allocation7], %s243
          %s245 = sand.u32 %s116, 1
          %s246 = smul.addr %s245, 64
          %s247 = scalar_lea.vmem [#allocation8], %s246
          %249 = vsyncadd %s244, 0
          %s250 = smul.addr %s17, 16
          %s251 = smul.addr %s250, 4
          %s252 = scalar_lea.hbm %s4, %s251
          %s253 = sshll.u32 %s252, 4
          %s254 = int_to_ptr.hbm [resolvable:$true] %s253
          %s255 = sshll.u32 %s247, 4
          %s256 = int_to_ptr.vmem [resolvable:$true] %s255
          %261 = dma.hbm_to_vmem [thread:$0]  %s254, 1024, %s256, %s244, 64, 64, 4
        $region36: #{tpu_custom_call.1} parent=27 // pred_fallthru
          _
        // Predicated region
        $region37: #{tpu_custom_call.1} parent=27 // pred_check
          %p262 = pneg %p152
        $region38: #{tpu_custom_call.1} parent=27 // pred_check_branch
          %264 = sbr.rel (%p262) target = $region40
        $region39: #{tpu_custom_call.1} parent=27 // pred_region
          %p265 = scmp.lt.s32.totalorder %s17, 2
          %s266 = scalar_select %p265, %s17, 2
          %s267 = scalar_lea.vmem %s5, %s266
        $region40: #{tpu_custom_call.1} parent=27 // pred_fallthru
          _
      $region28: #{tpu_custom_call.1} parent=5 // pred_fallthru
        _
      %p268 = scmp.le.s32.totalorder 1, %s17
      %p269 = scmp.lt.s32.totalorder %s17, 4
      %p270 = pnand %p268, %p269
      %p271 = pneg %p270
      // Predicated region
      $region41: #{tpu_custom_call.1} parent=5 // pred_check
        _
      $region42: #{tpu_custom_call.1} parent=5 // pred_check_branch
        %273 = sbr.rel (%p270) target = $region44
      $region43: #{tpu_custom_call.1} parent=5 // pred_region
        %s274 = ssub.s32 %s17, 1
        // Predicated region
        $region45: #{tpu_custom_call.1} parent=43 // pred_check
          %p275 = pneg %p80
        $region46: #{tpu_custom_call.1} parent=43 // pred_check_branch
          %277 = sbr.rel (%p275) target = $region48
        $region47: #{tpu_custom_call.1} parent=43 // pred_region
          %279 = dma.done [#allocation4], 3072
        $region48: #{tpu_custom_call.1} parent=43 // pred_fallthru
          _
        %s280 = sand.u32 %s22, 1
        %s281 = scalar_lea.sflag [#allocation7], %s280
        %s282 = sand.u32 %s93, 1
        %s283 = smul.addr %s282, 64
        %s284 = scalar_lea.vmem [#allocation6], %s283
        // Predicated region
        $region49: #{tpu_custom_call.1} parent=43 // pred_check
          %p285 = pneg %p106
        $region50: #{tpu_custom_call.1} parent=43 // pred_check_branch
          %287 = sbr.rel (%p285) target = $region52
        $region51: #{tpu_custom_call.1} parent=43 // pred_region
          %289 = dma.done %s281, 1024
        $region52: #{tpu_custom_call.1} parent=43 // pred_fallthru
          _
        %s290 = sand.u32 %s22, 1
        %s291 = scalar_lea.sflag [#allocation7], %s290
        %s292 = sand.u32 %s119, 1
        %s293 = smul.addr %s292, 64
        %s294 = scalar_lea.vmem [#allocation8], %s293
        // Predicated region
        $region53: #{tpu_custom_call.1} parent=43 // pred_check
          %p295 = pneg %p132
        $region54: #{tpu_custom_call.1} parent=43 // pred_check_branch
          %297 = sbr.rel (%p295) target = $region56
        $region55: #{tpu_custom_call.1} parent=43 // pred_region
          %299 = dma.done %s291, 1024
        $region56: #{tpu_custom_call.1} parent=43 // pred_fallthru
          _
        %p300 = pneg %p38
        %p301 = pneg %p35
        %p302 = pneg %p59
        %p303 = pneg %p56
        %p304 = pneg %p80
        %p305 = pneg %p77
        %s306 = sand.u32 %s22, 1
        %s307 = scalar_lea.sflag [#allocation7], %s306
        %s308 = sand.u32 %s93, 1
        %s309 = smul.addr %s308, 64
        %s310 = scalar_lea.vmem [#allocation6], %s309
        %p311 = pneg %p106
        %p312 = pneg %p103
        %s313 = sand.u32 %s22, 1
        %s314 = scalar_lea.sflag [#allocation7], %s313
        %s315 = sand.u32 %s119, 1
        %s316 = smul.addr %s315, 64
        %s317 = scalar_lea.vmem [#allocation8], %s316
        %p318 = pneg %p132
        %p319 = pneg %p129
        %p320 = scmp.lt.s32.totalorder %s22, 2
        %s321 = scalar_select %p320, %s22, 2
        %s322 = scalar_lea.vmem %s5, %s321
        %p323 = pneg %p158
        %p324 = pneg %p155
        %p325 = pneg %p179
        %p326 = pneg %p176
        %p327 = scmp.lt.s32.totalorder %s22, 2
        %s328 = scalar_select %p327, %s22, 2
        %s329 = scalar_lea.vmem %s5, %s328
        %p330 = scmp.eq.s32.totalorder %s22, 0
        // Predicated region
        $region57: #{tpu_custom_call.1} parent=43 // pred_check
          %p331 = pneg %p330
        $region58: #{tpu_custom_call.1} parent=43 // pred_check_branch
          %333 = sbr.rel (%p331) target = $region60
        $region59: #{tpu_custom_call.1} parent=43 // pred_region
          %v334 = vld [vmem:[#allocation3] sm:$0xf]
          %v335 = vld [vmem:[#allocation3 + $0x4] sm:$0xf]
          %v336 = vld [vmem:[#allocation3 + $0x8] sm:$0xf]
          %v337 = vld [vmem:[#allocation3 + $0xc] sm:$0xf]
          %v338 = vld [vmem:[#allocation3 + $0x10] sm:$0xf]
          %v339 = vld [vmem:[#allocation3 + $0x14] sm:$0xf]
          %v340 = vld [vmem:[#allocation3 + $0x18] sm:$0xf]
          %v341 = vld [vmem:[#allocation3 + $0x1c] sm:$0xf]
          %v342 = vld [vmem:[#allocation3 + $0x20] sm:$0xf]
          %v343 = vld [vmem:[#allocation3 + $0x24] sm:$0xf]
          %v344 = vld [vmem:[#allocation3 + $0x28] sm:$0xf]
          %v345 = vld [vmem:[#allocation3 + $0x2c] sm:$0xf]
          %v346 = vld [vmem:[#allocation3 + $0x30] sm:$0xf]
          %v347 = vld [vmem:[#allocation3 + $0x34] sm:$0xf]
          %v348 = vld [vmem:[#allocation3 + $0x38] sm:$0xf]
          %v349 = vld [vmem:[#allocation3 + $0x3c] sm:$0xf]
          %v350 = vld [vmem:[#allocation3 + $0x40] sm:$0xf]
          %v351 = vld [vmem:[#allocation3 + $0x44] sm:$0xf]
          %v352 = vld [vmem:[#allocation3 + $0x48] sm:$0xf]
          %v353 = vld [vmem:[#allocation3 + $0x4c] sm:$0xf]
          %v354 = vld [vmem:[#allocation3 + $0x50] sm:$0xf]
          %v355 = vld [vmem:[#allocation3 + $0x54] sm:$0xf]
          %v356 = vld [vmem:[#allocation3 + $0x58] sm:$0xf]
          %v357 = vld [vmem:[#allocation3 + $0x5c] sm:$0xf]
          %v358 = vld [vmem:[#allocation3 + $0x60] sm:$0xf]
          %v359 = vld [vmem:[#allocation3 + $0x64] sm:$0xf]
          %v360 = vld [vmem:[#allocation3 + $0x68] sm:$0xf]
          %v361 = vld [vmem:[#allocation3 + $0x6c] sm:$0xf]
          %v362 = vld [vmem:[#allocation3 + $0x70] sm:$0xf]
          %v363 = vld [vmem:[#allocation3 + $0x74] sm:$0xf]
          %v364 = vld [vmem:[#allocation3 + $0x78] sm:$0xf]
          %v365 = vld [vmem:[#allocation3 + $0x7c] sm:$0xf]
          %v366 = vld [vmem:[#allocation3 + $0x80] sm:$0xf]
          %v367 = vld [vmem:[#allocation3 + $0x84] sm:$0xf]
          %v368 = vld [vmem:[#allocation3 + $0x88] sm:$0xf]
          %v369 = vld [vmem:[#allocation3 + $0x8c] sm:$0xf]
          %v370 = vld [vmem:[#allocation3 + $0x90] sm:$0xf]
          %v371 = vld [vmem:[#allocation3 + $0x94] sm:$0xf]
          %v372 = vld [vmem:[#allocation3 + $0x98] sm:$0xf]
          %v373 = vld [vmem:[#allocation3 + $0x9c] sm:$0xf]
          %v374 = vld [vmem:[#allocation3 + $0xa0] sm:$0xf]
          %v375 = vld [vmem:[#allocation3 + $0xa4] sm:$0xf]
          %v376 = vld [vmem:[#allocation3 + $0xa8] sm:$0xf]
          %v377 = vld [vmem:[#allocation3 + $0xac] sm:$0xf]
          %v378 = vld [vmem:[#allocation3 + $0xb0] sm:$0xf]
          %v379 = vld [vmem:[#allocation3 + $0xb4] sm:$0xf]
          %v380 = vld [vmem:[#allocation3 + $0xb8] sm:$0xf]
          %v381 = vld [vmem:[#allocation3 + $0xbc] sm:$0xf]
          %382 = vst [vmem:[#allocation2] sm:$0xf] %v334
          %383 = vst [vmem:[#allocation2 + $0x4] sm:$0xf] %v335
          %384 = vst [vmem:[#allocation2 + $0x8] sm:$0xf] %v336
          %385 = vst [vmem:[#allocation2 + $0xc] sm:$0xf] %v337
          %386 = vst [vmem:[#allocation2 + $0x10] sm:$0xf] %v338
          %387 = vst [vmem:[#allocation2 + $0x14] sm:$0xf] %v339
          %388 = vst [vmem:[#allocation2 + $0x18] sm:$0xf] %v340
          %389 = vst [vmem:[#allocation2 + $0x1c] sm:$0xf] %v341
          %390 = vst [vmem:[#allocation2 + $0x20] sm:$0xf] %v342
          %391 = vst [vmem:[#allocation2 + $0x24] sm:$0xf] %v343
          %392 = vst [vmem:[#allocation2 + $0x28] sm:$0xf] %v344
          %393 = vst [vmem:[#allocation2 + $0x2c] sm:$0xf] %v345
          %394 = vst [vmem:[#allocation2 + $0x30] sm:$0xf] %v346
          %395 = vst [vmem:[#allocation2 + $0x34] sm:$0xf] %v347
          %396 = vst [vmem:[#allocation2 + $0x38] sm:$0xf] %v348
          %397 = vst [vmem:[#allocation2 + $0x3c] sm:$0xf] %v349
          %398 = vst [vmem:[#allocation2 + $0x40] sm:$0xf] %v350
          %399 = vst [vmem:[#allocation2 + $0x44] sm:$0xf] %v351
          %400 = vst [vmem:[#allocation2 + $0x48] sm:$0xf] %v352
          %401 = vst [vmem:[#allocation2 + $0x4c] sm:$0xf] %v353
          %402 = vst [vmem:[#allocation2 + $0x50] sm:$0xf] %v354
          %403 = vst [vmem:[#allocation2 + $0x54] sm:$0xf] %v355
          %404 = vst [vmem:[#allocation2 + $0x58] sm:$0xf] %v356
          %405 = vst [vmem:[#allocation2 + $0x5c] sm:$0xf] %v357
          %406 = vst [vmem:[#allocation2 + $0x60] sm:$0xf] %v358
          %407 = vst [vmem:[#allocation2 + $0x64] sm:$0xf] %v359
          %408 = vst [vmem:[#allocation2 + $0x68] sm:$0xf] %v360
          %409 = vst [vmem:[#allocation2 + $0x6c] sm:$0xf] %v361
          %410 = vst [vmem:[#allocation2 + $0x70] sm:$0xf] %v362
          %411 = vst [vmem:[#allocation2 + $0x74] sm:$0xf] %v363
          %412 = vst [vmem:[#allocation2 + $0x78] sm:$0xf] %v364
          %413 = vst [vmem:[#allocation2 + $0x7c] sm:$0xf] %v365
          %414 = vst [vmem:[#allocation2 + $0x80] sm:$0xf] %v366
          %415 = vst [vmem:[#allocation2 + $0x84] sm:$0xf] %v367
          %416 = vst [vmem:[#allocation2 + $0x88] sm:$0xf] %v368
          %417 = vst [vmem:[#allocation2 + $0x8c] sm:$0xf] %v369
          %418 = vst [vmem:[#allocation2 + $0x90] sm:$0xf] %v370
          %419 = vst [vmem:[#allocation2 + $0x94] sm:$0xf] %v371
          %420 = vst [vmem:[#allocation2 + $0x98] sm:$0xf] %v372
          %421 = vst [vmem:[#allocation2 + $0x9c] sm:$0xf] %v373
          %422 = vst [vmem:[#allocation2 + $0xa0] sm:$0xf] %v374
          %423 = vst [vmem:[#allocation2 + $0xa4] sm:$0xf] %v375
          %424 = vst [vmem:[#allocation2 + $0xa8] sm:$0xf] %v376
          %425 = vst [vmem:[#allocation2 + $0xac] sm:$0xf] %v377
          %426 = vst [vmem:[#allocation2 + $0xb0] sm:$0xf] %v378
          %427 = vst [vmem:[#allocation2 + $0xb4] sm:$0xf] %v379
          %428 = vst [vmem:[#allocation2 + $0xb8] sm:$0xf] %v380
          %429 = vst [vmem:[#allocation2 + $0xbc] sm:$0xf] %v381
        $region60: #{tpu_custom_call.1} parent=43 // pred_fallthru
          _
        %p430 = scmp.lt.s32.totalorder %s22, 0
        %s431 = ssub.s32 0, %s22
        %s432 = scalar_select %p430, %s431, %s22
        %s433 = sand.u32 %s432, 1
        %s434 = ssub.s32 0, %s433
        %s435 = scalar_select %p430, %s434, %s433
        %p436 = scmp.ne.s32.totalorder %s435, 0
        %p437 = scmp.lt.s32.totalorder %s435, 0
        %p438 = pnand %p437, %p436
        %p439 = pneg %p438
        %s440 = sadd.s32 %s435, 2
        %s441 = scalar_select %p439, %s440, %s435
        %s442 = smul.u32 %s441, 48
        %s443 = smul.addr %s442, 4
        %s444 = scalar_lea.vmem [#allocation2], %s443
        %v445 = vld [vmem:[%s444] sm:$0xf]
        %v446 = vld [vmem:[%s444 + $0x4] sm:$0xf]
        %v447 = vld [vmem:[%s444 + $0x8] sm:$0xf]
        %v448 = vld [vmem:[%s444 + $0xc] sm:$0xf]
        %v449 = vld [vmem:[%s444 + $0x10] sm:$0xf]
        %v450 = vld [vmem:[%s444 + $0x14] sm:$0xf]
        %v451 = vld [vmem:[%s444 + $0x18] sm:$0xf]
        %v452 = vld [vmem:[%s444 + $0x1c] sm:$0xf]
        %v453 = vld [vmem:[%s444 + $0x20] sm:$0xf]
        %v454 = vld [vmem:[%s444 + $0x24] sm:$0xf]
        %v455 = vld [vmem:[%s444 + $0x28] sm:$0xf]
        %v456 = vld [vmem:[%s444 + $0x2c] sm:$0xf]
        %v457 = vld [vmem:[%s444 + $0x30] sm:$0xf]
        %v458 = vld [vmem:[%s444 + $0x34] sm:$0xf]
        %v459 = vld [vmem:[%s444 + $0x38] sm:$0xf]
        %v460 = vld [vmem:[%s444 + $0x3c] sm:$0xf]
        %v461 = vld [vmem:[%s444 + $0x40] sm:$0xf]
        %v462 = vld [vmem:[%s444 + $0x44] sm:$0xf]
        %v463 = vld [vmem:[%s444 + $0x48] sm:$0xf]
        %v464 = vld [vmem:[%s444 + $0x4c] sm:$0xf]
        %v465 = vld [vmem:[%s444 + $0x50] sm:$0xf]
        %v466 = vld [vmem:[%s444 + $0x54] sm:$0xf]
        %v467 = vld [vmem:[%s444 + $0x58] sm:$0xf]
        %v468 = vld [vmem:[%s444 + $0x5c] sm:$0xf]
        %v469 = vld [vmem:[%s444 + $0x60] sm:$0xf]
        %v470 = vld [vmem:[%s444 + $0x64] sm:$0xf]
        %v471 = vld [vmem:[%s444 + $0x68] sm:$0xf]
        %v472 = vld [vmem:[%s444 + $0x6c] sm:$0xf]
        %v473 = vld [vmem:[%s444 + $0x70] sm:$0xf]
        %v474 = vld [vmem:[%s444 + $0x74] sm:$0xf]
        %v475 = vld [vmem:[%s444 + $0x78] sm:$0xf]
        %v476 = vld [vmem:[%s444 + $0x7c] sm:$0xf]
        %v477 = vld [vmem:[%s444 + $0x80] sm:$0xf]
        %v478 = vld [vmem:[%s444 + $0x84] sm:$0xf]
        %v479 = vld [vmem:[%s444 + $0x88] sm:$0xf]
        %v480 = vld [vmem:[%s444 + $0x8c] sm:$0xf]
        %v481 = vld [vmem:[%s444 + $0x90] sm:$0xf]
        %v482 = vld [vmem:[%s444 + $0x94] sm:$0xf]
        %v483 = vld [vmem:[%s444 + $0x98] sm:$0xf]
        %v484 = vld [vmem:[%s444 + $0x9c] sm:$0xf]
        %v485 = vld [vmem:[%s444 + $0xa0] sm:$0xf]
        %v486 = vld [vmem:[%s444 + $0xa4] sm:$0xf]
        %v487 = vld [vmem:[%s444 + $0xa8] sm:$0xf]
        %v488 = vld [vmem:[%s444 + $0xac] sm:$0xf]
        %v489 = vld [vmem:[%s444 + $0xb0] sm:$0xf]
        %v490 = vld [vmem:[%s444 + $0xb4] sm:$0xf]
        %v491 = vld [vmem:[%s444 + $0xb8] sm:$0xf]
        %v492 = vld [vmem:[%s444 + $0xbc] sm:$0xf]
        %v493 = vld [vmem:[%s0] sm:$0xff]
        %v494 = vld [vmem:[%s0 + $0x8] sm:$0xff]
        %v495 = vld [vmem:[%s0 + $0x10] sm:$0xff]
        %v496 = vld [vmem:[%s0 + $0x18] sm:$0xff]
        %v497 = vld [vmem:[%s0 + $0x20] sm:$0xff]
        %v498 = vld [vmem:[%s0 + $0x28] sm:$0xff]
        %v499 = vld [vmem:[%s0 + $0x30] sm:$0xff]
        %v500 = vld [vmem:[%s0 + $0x38] sm:$0xff]
        %v501 = vld [vmem:[%s0 + $0x40] sm:$0xff]
        %v502 = vld [vmem:[%s0 + $0x48] sm:$0xff]
        %v503 = vld [vmem:[%s0 + $0x50] sm:$0xff]
        %v504 = vld [vmem:[%s0 + $0x58] sm:$0xff]
        %v505 = vld [vmem:[%s0 + $0x60] sm:$0xff]
        %v506 = vld [vmem:[%s0 + $0x68] sm:$0xff]
        %v507 = vld [vmem:[%s0 + $0x70] sm:$0xff]
        %v508 = vld [vmem:[%s0 + $0x78] sm:$0xff]
        %v509 = vld [vmem:[%s0 + $0x80] sm:$0xff]
        %v510 = vld [vmem:[%s0 + $0x88] sm:$0xff]
        %v511 = vld [vmem:[%s0 + $0x90] sm:$0xff]
        %v512 = vld [vmem:[%s0 + $0x98] sm:$0xff]
        %v513 = vld [vmem:[%s0 + $0xa0] sm:$0xff]
        %v514 = vld [vmem:[%s0 + $0xa8] sm:$0xff]
        %v515 = vld [vmem:[%s0 + $0xb0] sm:$0xff]
        %v516 = vld [vmem:[%s0 + $0xb8] sm:$0xff]
        %v517 = vld [vmem:[%s0 + $0xc0] sm:$0xff]
        %v518 = vld [vmem:[%s0 + $0xc8] sm:$0xff]
        %v519 = vld [vmem:[%s0 + $0xd0] sm:$0xff]
        %v520 = vld [vmem:[%s0 + $0xd8] sm:$0xff]
        %v521 = vld [vmem:[%s0 + $0xe0] sm:$0xff]
        %v522 = vld [vmem:[%s0 + $0xe8] sm:$0xff]
        %v523 = vld [vmem:[%s0 + $0xf0] sm:$0xff]
        %v524 = vld [vmem:[%s0 + $0xf8] sm:$0xff]
        %v525 = vld [vmem:[%s0 + $0x100] sm:$0xff]
        %v526 = vld [vmem:[%s0 + $0x108] sm:$0xff]
        %v527 = vld [vmem:[%s0 + $0x110] sm:$0xff]
        %v528 = vld [vmem:[%s0 + $0x118] sm:$0xff]
        %v529 = vunpack.c.0.s8 %v493
        %v530 = vunpack.c.0.s8 %v494
        %v531 = vunpack.c.0.s8 %v495
        %v532 = vunpack.c.1.s8 %v493
        %v533 = vunpack.c.1.s8 %v494
        %v534 = vunpack.c.1.s8 %v495
        %v535 = vunpack.c.2.s8 %v493
        %v536 = vunpack.c.2.s8 %v494
        %v537 = vunpack.c.2.s8 %v495
        %v538 = vunpack.c.3.s8 %v493
        %v539 = vunpack.c.3.s8 %v494
        %v540 = vunpack.c.3.s8 %v495
        %v541 = vunpack.c.0.s8 %v496
        %v542 = vunpack.c.0.s8 %v497
        %v543 = vunpack.c.0.s8 %v498
        %v544 = vunpack.c.1.s8 %v496
        %v545 = vunpack.c.1.s8 %v497
        %v546 = vunpack.c.1.s8 %v498
        %v547 = vunpack.c.2.s8 %v496
        %v548 = vunpack.c.2.s8 %v497
        %v549 = vunpack.c.2.s8 %v498
        %v550 = vunpack.c.3.s8 %v496
        %v551 = vunpack.c.3.s8 %v497
        %v552 = vunpack.c.3.s8 %v498
        %v553 = vunpack.c.0.s8 %v499
        %v554 = vunpack.c.0.s8 %v500
        %v555 = vunpack.c.0.s8 %v501
        %v556 = vunpack.c.1.s8 %v499
        %v557 = vunpack.c.1.s8 %v500
        %v558 = vunpack.c.1.s8 %v501
        %v559 = vunpack.c.2.s8 %v499
        %v560 = vunpack.c.2.s8 %v500
        %v561 = vunpack.c.2.s8 %v501
        %v562 = vunpack.c.3.s8 %v499
        %v563 = vunpack.c.3.s8 %v500
        %v564 = vunpack.c.3.s8 %v501
        %v565 = vunpack.c.0.s8 %v502
        %v566 = vunpack.c.0.s8 %v503
        %v567 = vunpack.c.0.s8 %v504
        %v568 = vunpack.c.1.s8 %v502
        %v569 = vunpack.c.1.s8 %v503
        %v570 = vunpack.c.1.s8 %v504
        %v571 = vunpack.c.2.s8 %v502
        %v572 = vunpack.c.2.s8 %v503
        %v573 = vunpack.c.2.s8 %v504
        %v574 = vunpack.c.3.s8 %v502
        %v575 = vunpack.c.3.s8 %v503
        %v576 = vunpack.c.3.s8 %v504
        %v577 = vunpack.c.0.s8 %v505
        %v578 = vunpack.c.0.s8 %v506
        %v579 = vunpack.c.0.s8 %v507
        %v580 = vunpack.c.1.s8 %v505
        %v581 = vunpack.c.1.s8 %v506
        %v582 = vunpack.c.1.s8 %v507
        %v583 = vunpack.c.2.s8 %v505
        %v584 = vunpack.c.2.s8 %v506
        %v585 = vunpack.c.2.s8 %v507
        %v586 = vunpack.c.3.s8 %v505
        %v587 = vunpack.c.3.s8 %v506
        %v588 = vunpack.c.3.s8 %v507
        %v589 = vunpack.c.0.s8 %v508
        %v590 = vunpack.c.0.s8 %v509
        %v591 = vunpack.c.0.s8 %v510
        %v592 = vunpack.c.1.s8 %v508
        %v593 = vunpack.c.1.s8 %v509
        %v594 = vunpack.c.1.s8 %v510
        %v595 = vunpack.c.2.s8 %v508
        %v596 = vunpack.c.2.s8 %v509
        %v597 = vunpack.c.2.s8 %v510
        %v598 = vunpack.c.3.s8 %v508
        %v599 = vunpack.c.3.s8 %v509
        %v600 = vunpack.c.3.s8 %v510
        %v601 = vunpack.c.0.s8 %v511
        %v602 = vunpack.c.0.s8 %v512
        %v603 = vunpack.c.0.s8 %v513
        %v604 = vunpack.c.1.s8 %v511
        %v605 = vunpack.c.1.s8 %v512
        %v606 = vunpack.c.1.s8 %v513
        %v607 = vunpack.c.2.s8 %v511
        %v608 = vunpack.c.2.s8 %v512
        %v609 = vunpack.c.2.s8 %v513
        %v610 = vunpack.c.3.s8 %v511
        %v611 = vunpack.c.3.s8 %v512
        %v612 = vunpack.c.3.s8 %v513
        %v613 = vunpack.c.0.s8 %v514
        %v614 = vunpack.c.0.s8 %v515
        %v615 = vunpack.c.0.s8 %v516
        %v616 = vunpack.c.1.s8 %v514
        %v617 = vunpack.c.1.s8 %v515
        %v618 = vunpack.c.1.s8 %v516
        %v619 = vunpack.c.2.s8 %v514
        %v620 = vunpack.c.2.s8 %v515
        %v621 = vunpack.c.2.s8 %v516
        %v622 = vunpack.c.3.s8 %v514
        %v623 = vunpack.c.3.s8 %v515
        %v624 = vunpack.c.3.s8 %v516
        %v625 = vunpack.c.0.s8 %v517
        %v626 = vunpack.c.0.s8 %v518
        %v627 = vunpack.c.0.s8 %v519
        %v628 = vunpack.c.1.s8 %v517
        %v629 = vunpack.c.1.s8 %v518
        %v630 = vunpack.c.1.s8 %v519
        %v631 = vunpack.c.2.s8 %v517
        %v632 = vunpack.c.2.s8 %v518
        %v633 = vunpack.c.2.s8 %v519
        %v634 = vunpack.c.3.s8 %v517
        %v635 = vunpack.c.3.s8 %v518
        %v636 = vunpack.c.3.s8 %v519
        %v637 = vunpack.c.0.s8 %v520
        %v638 = vunpack.c.0.s8 %v521
        %v639 = vunpack.c.0.s8 %v522
        %v640 = vunpack.c.1.s8 %v520
        %v641 = vunpack.c.1.s8 %v521
        %v642 = vunpack.c.1.s8 %v522
        %v643 = vunpack.c.2.s8 %v520
        %v644 = vunpack.c.2.s8 %v521
        %v645 = vunpack.c.2.s8 %v522
        %v646 = vunpack.c.3.s8 %v520
        %v647 = vunpack.c.3.s8 %v521
        %v648 = vunpack.c.3.s8 %v522
        %v649 = vunpack.c.0.s8 %v523
        %v650 = vunpack.c.0.s8 %v524
        %v651 = vunpack.c.0.s8 %v525
        %v652 = vunpack.c.1.s8 %v523
        %v653 = vunpack.c.1.s8 %v524
        %v654 = vunpack.c.1.s8 %v525
        %v655 = vunpack.c.2.s8 %v523
        %v656 = vunpack.c.2.s8 %v524
        %v657 = vunpack.c.2.s8 %v525
        %v658 = vunpack.c.3.s8 %v523
        %v659 = vunpack.c.3.s8 %v524
        %v660 = vunpack.c.3.s8 %v525
        %v661 = vunpack.c.0.s8 %v526
        %v662 = vunpack.c.0.s8 %v527
        %v663 = vunpack.c.0.s8 %v528
        %v664 = vunpack.c.1.s8 %v526
        %v665 = vunpack.c.1.s8 %v527
        %v666 = vunpack.c.1.s8 %v528
        %v667 = vunpack.c.2.s8 %v526
        %v668 = vunpack.c.2.s8 %v527
        %v669 = vunpack.c.2.s8 %v528
        %v670 = vunpack.c.3.s8 %v526
        %v671 = vunpack.c.3.s8 %v527
        %v672 = vunpack.c.3.s8 %v528
        %v673 = vcvt.s32.f32 %v529
        %v674 = vcvt.s32.f32 %v530
        %v675 = vcvt.s32.f32 %v531
        %v676 = vcvt.s32.f32 %v532
        %v677 = vcvt.s32.f32 %v533
        %v678 = vcvt.s32.f32 %v534
        %v679 = vcvt.s32.f32 %v535
        %v680 = vcvt.s32.f32 %v536
        %v681 = vcvt.s32.f32 %v537
        %v682 = vcvt.s32.f32 %v538
        %v683 = vcvt.s32.f32 %v539
        %v684 = vcvt.s32.f32 %v540
        %v685 = vcvt.s32.f32 %v541
        %v686 = vcvt.s32.f32 %v542
        %v687 = vcvt.s32.f32 %v543
        %v688 = vcvt.s32.f32 %v544
        %v689 = vcvt.s32.f32 %v545
        %v690 = vcvt.s32.f32 %v546
        %v691 = vcvt.s32.f32 %v547
        %v692 = vcvt.s32.f32 %v548
        %v693 = vcvt.s32.f32 %v549
        %v694 = vcvt.s32.f32 %v550
        %v695 = vcvt.s32.f32 %v551
        %v696 = vcvt.s32.f32 %v552
        %v697 = vcvt.s32.f32 %v553
        %v698 = vcvt.s32.f32 %v554
        %v699 = vcvt.s32.f32 %v555
        %v700 = vcvt.s32.f32 %v556
        %v701 = vcvt.s32.f32 %v557
        %v702 = vcvt.s32.f32 %v558
        %v703 = vcvt.s32.f32 %v559
        %v704 = vcvt.s32.f32 %v560
        %v705 = vcvt.s32.f32 %v561
        %v706 = vcvt.s32.f32 %v562
        %v707 = vcvt.s32.f32 %v563
        %v708 = vcvt.s32.f32 %v564
        %v709 = vcvt.s32.f32 %v565
        %v710 = vcvt.s32.f32 %v566
        %v711 = vcvt.s32.f32 %v567
        %v712 = vcvt.s32.f32 %v568
        %v713 = vcvt.s32.f32 %v569
        %v714 = vcvt.s32.f32 %v570
        %v715 = vcvt.s32.f32 %v571
        %v716 = vcvt.s32.f32 %v572
        %v717 = vcvt.s32.f32 %v573
        %v718 = vcvt.s32.f32 %v574
        %v719 = vcvt.s32.f32 %v575
        %v720 = vcvt.s32.f32 %v576
        %v721 = vcvt.s32.f32 %v577
        %v722 = vcvt.s32.f32 %v578
        %v723 = vcvt.s32.f32 %v579
        %v724 = vcvt.s32.f32 %v580
        %v725 = vcvt.s32.f32 %v581
        %v726 = vcvt.s32.f32 %v582
        %v727 = vcvt.s32.f32 %v583
        %v728 = vcvt.s32.f32 %v584
        %v729 = vcvt.s32.f32 %v585
        %v730 = vcvt.s32.f32 %v586
        %v731 = vcvt.s32.f32 %v587
        %v732 = vcvt.s32.f32 %v588
        %v733 = vcvt.s32.f32 %v589
        %v734 = vcvt.s32.f32 %v590
        %v735 = vcvt.s32.f32 %v591
        %v736 = vcvt.s32.f32 %v592
        %v737 = vcvt.s32.f32 %v593
        %v738 = vcvt.s32.f32 %v594
        %v739 = vcvt.s32.f32 %v595
        %v740 = vcvt.s32.f32 %v596
        %v741 = vcvt.s32.f32 %v597
        %v742 = vcvt.s32.f32 %v598
        %v743 = vcvt.s32.f32 %v599
        %v744 = vcvt.s32.f32 %v600
        %v745 = vcvt.s32.f32 %v601
        %v746 = vcvt.s32.f32 %v602
        %v747 = vcvt.s32.f32 %v603
        %v748 = vcvt.s32.f32 %v604
        %v749 = vcvt.s32.f32 %v605
        %v750 = vcvt.s32.f32 %v606
        %v751 = vcvt.s32.f32 %v607
        %v752 = vcvt.s32.f32 %v608
        %v753 = vcvt.s32.f32 %v609
        %v754 = vcvt.s32.f32 %v610
        %v755 = vcvt.s32.f32 %v611
        %v756 = vcvt.s32.f32 %v612
        %v757 = vcvt.s32.f32 %v613
        %v758 = vcvt.s32.f32 %v614
        %v759 = vcvt.s32.f32 %v615
        %v760 = vcvt.s32.f32 %v616
        %v761 = vcvt.s32.f32 %v617
        %v762 = vcvt.s32.f32 %v618
        %v763 = vcvt.s32.f32 %v619
        %v764 = vcvt.s32.f32 %v620
        %v765 = vcvt.s32.f32 %v621
        %v766 = vcvt.s32.f32 %v622
        %v767 = vcvt.s32.f32 %v623
        %v768 = vcvt.s32.f32 %v624
        %v769 = vcvt.s32.f32 %v625
        %v770 = vcvt.s32.f32 %v626
        %v771 = vcvt.s32.f32 %v627
        %v772 = vcvt.s32.f32 %v628
        %v773 = vcvt.s32.f32 %v629
        %v774 = vcvt.s32.f32 %v630
        %v775 = vcvt.s32.f32 %v631
        %v776 = vcvt.s32.f32 %v632
        %v777 = vcvt.s32.f32 %v633
        %v778 = vcvt.s32.f32 %v634
        %v779 = vcvt.s32.f32 %v635
        %v780 = vcvt.s32.f32 %v636
        %v781 = vcvt.s32.f32 %v637
        %v782 = vcvt.s32.f32 %v638
        %v783 = vcvt.s32.f32 %v639
        %v784 = vcvt.s32.f32 %v640
        %v785 = vcvt.s32.f32 %v641
        %v786 = vcvt.s32.f32 %v642
        %v787 = vcvt.s32.f32 %v643
        %v788 = vcvt.s32.f32 %v644
        %v789 = vcvt.s32.f32 %v645
        %v790 = vcvt.s32.f32 %v646
        %v791 = vcvt.s32.f32 %v647
        %v792 = vcvt.s32.f32 %v648
        %v793 = vcvt.s32.f32 %v649
        %v794 = vcvt.s32.f32 %v650
        %v795 = vcvt.s32.f32 %v651
        %v796 = vcvt.s32.f32 %v652
        %v797 = vcvt.s32.f32 %v653
        %v798 = vcvt.s32.f32 %v654
        %v799 = vcvt.s32.f32 %v655
        %v800 = vcvt.s32.f32 %v656
        %v801 = vcvt.s32.f32 %v657
        %v802 = vcvt.s32.f32 %v658
        %v803 = vcvt.s32.f32 %v659
        %v804 = vcvt.s32.f32 %v660
        %v805 = vcvt.s32.f32 %v661
        %v806 = vcvt.s32.f32 %v662
        %v807 = vcvt.s32.f32 %v663
        %v808 = vcvt.s32.f32 %v664
        %v809 = vcvt.s32.f32 %v665
        %v810 = vcvt.s32.f32 %v666
        %v811 = vcvt.s32.f32 %v667
        %v812 = vcvt.s32.f32 %v668
        %v813 = vcvt.s32.f32 %v669
        %v814 = vcvt.s32.f32 %v670
        %v815 = vcvt.s32.f32 %v671
        %v816 = vcvt.s32.f32 %v672
        %v817 = vpack.c.bf16 %v676, %v673
        %v818 = vpack.c.bf16 %v677, %v674
        %v819 = vpack.c.bf16 %v678, %v675
        %v820 = vpack.c.bf16 %v682, %v679
        %v821 = vpack.c.bf16 %v683, %v680
        %v822 = vpack.c.bf16 %v684, %v681
        %v823 = vpack.c.bf16 %v688, %v685
        %v824 = vpack.c.bf16 %v689, %v686
        %v825 = vpack.c.bf16 %v690, %v687
        %v826 = vpack.c.bf16 %v694, %v691
        %v827 = vpack.c.bf16 %v695, %v692
        %v828 = vpack.c.bf16 %v696, %v693
        %v829 = vpack.c.bf16 %v700, %v697
        %v830 = vpack.c.bf16 %v701, %v698
        %v831 = vpack.c.bf16 %v702, %v699
        %v832 = vpack.c.bf16 %v706, %v703
        %v833 = vpack.c.bf16 %v707, %v704
        %v834 = vpack.c.bf16 %v708, %v705
        %v835 = vpack.c.bf16 %v712, %v709
        %v836 = vpack.c.bf16 %v713, %v710
        %v837 = vpack.c.bf16 %v714, %v711
        %v838 = vpack.c.bf16 %v718, %v715
        %v839 = vpack.c.bf16 %v719, %v716
        %v840 = vpack.c.bf16 %v720, %v717
        %v841 = vpack.c.bf16 %v724, %v721
        %v842 = vpack.c.bf16 %v725, %v722
        %v843 = vpack.c.bf16 %v726, %v723
        %v844 = vpack.c.bf16 %v730, %v727
        %v845 = vpack.c.bf16 %v731, %v728
        %v846 = vpack.c.bf16 %v732, %v729
        %v847 = vpack.c.bf16 %v736, %v733
        %v848 = vpack.c.bf16 %v737, %v734
        %v849 = vpack.c.bf16 %v738, %v735
        %v850 = vpack.c.bf16 %v742, %v739
        %v851 = vpack.c.bf16 %v743, %v740
        %v852 = vpack.c.bf16 %v744, %v741
        %v853 = vpack.c.bf16 %v748, %v745
        %v854 = vpack.c.bf16 %v749, %v746
        %v855 = vpack.c.bf16 %v750, %v747
        %v856 = vpack.c.bf16 %v754, %v751
        %v857 = vpack.c.bf16 %v755, %v752
        %v858 = vpack.c.bf16 %v756, %v753
        %v859 = vpack.c.bf16 %v760, %v757
        %v860 = vpack.c.bf16 %v761, %v758
        %v861 = vpack.c.bf16 %v762, %v759
        %v862 = vpack.c.bf16 %v766, %v763
        %v863 = vpack.c.bf16 %v767, %v764
        %v864 = vpack.c.bf16 %v768, %v765
        %v865 = vpack.c.bf16 %v772, %v769
        %v866 = vpack.c.bf16 %v773, %v770
        %v867 = vpack.c.bf16 %v774, %v771
        %v868 = vpack.c.bf16 %v778, %v775
        %v869 = vpack.c.bf16 %v779, %v776
        %v870 = vpack.c.bf16 %v780, %v777
        %v871 = vpack.c.bf16 %v784, %v781
        %v872 = vpack.c.bf16 %v785, %v782
        %v873 = vpack.c.bf16 %v786, %v783
        %v874 = vpack.c.bf16 %v790, %v787
        %v875 = vpack.c.bf16 %v791, %v788
        %v876 = vpack.c.bf16 %v792, %v789
        %v877 = vpack.c.bf16 %v796, %v793
        %v878 = vpack.c.bf16 %v797, %v794
        %v879 = vpack.c.bf16 %v798, %v795
        %v880 = vpack.c.bf16 %v802, %v799
        %v881 = vpack.c.bf16 %v803, %v800
        %v882 = vpack.c.bf16 %v804, %v801
        %v883 = vpack.c.bf16 %v808, %v805
        %v884 = vpack.c.bf16 %v809, %v806
        %v885 = vpack.c.bf16 %v810, %v807
        %v886 = vpack.c.bf16 %v814, %v811
        %v887 = vpack.c.bf16 %v815, %v812
        %v888 = vpack.c.bf16 %v816, %v813
        %v937 = vunpack.c.l.b16 %v445
        %v938 = vunpack.c.l.b16 %v446
        %v939 = vunpack.c.l.b16 %v447
        %v940 = vunpack.c.l.b16 %v448
        %v941 = vunpack.c.l.b16 %v449
        %v942 = vunpack.c.l.b16 %v450
        %v943 = vunpack.c.l.b16 %v451
        %v944 = vunpack.c.l.b16 %v452
        %v945 = vunpack.c.l.b16 %v453
        %v946 = vunpack.c.l.b16 %v454
        %v947 = vunpack.c.l.b16 %v455
        %v948 = vunpack.c.l.b16 %v456
        %v949 = vunpack.c.l.b16 %v457
        %v950 = vunpack.c.l.b16 %v458
        %v951 = vunpack.c.l.b16 %v459
        %v952 = vunpack.c.l.b16 %v460
        %v953 = vunpack.c.l.b16 %v461
        %v954 = vunpack.c.l.b16 %v462
        %v955 = vunpack.c.l.b16 %v463
        %v956 = vunpack.c.l.b16 %v464
        %v957 = vunpack.c.l.b16 %v465
        %v958 = vunpack.c.l.b16 %v466
        %v959 = vunpack.c.l.b16 %v467
        %v960 = vunpack.c.l.b16 %v468
        %v961 = vunpack.c.l.b16 %v469
        %v962 = vunpack.c.l.b16 %v470
        %v963 = vunpack.c.l.b16 %v471
        %v964 = vunpack.c.l.b16 %v472
        %v965 = vunpack.c.l.b16 %v473
        %v966 = vunpack.c.l.b16 %v474
        %v967 = vunpack.c.l.b16 %v475
        %v968 = vunpack.c.l.b16 %v476
        %v969 = vunpack.c.l.b16 %v477
        %v970 = vunpack.c.l.b16 %v478
        %v971 = vunpack.c.l.b16 %v479
        %v972 = vunpack.c.l.b16 %v480
        %v973 = vunpack.c.l.b16 %v481
        %v974 = vunpack.c.l.b16 %v482
        %v975 = vunpack.c.l.b16 %v483
        %v976 = vunpack.c.l.b16 %v484
        %v977 = vunpack.c.l.b16 %v485
        %v978 = vunpack.c.l.b16 %v486
        %v979 = vunpack.c.l.b16 %v487
        %v980 = vunpack.c.l.b16 %v488
        %v981 = vunpack.c.l.b16 %v489
        %v982 = vunpack.c.l.b16 %v490
        %v983 = vunpack.c.l.b16 %v491
        %v984 = vunpack.c.l.b16 %v492
        %v985 = vpack.c.b16 %v938, %v937
        %v986 = vpack.c.b16 %v940, %v939
        %v987 = vpack.c.b16 %v942, %v941
        %v988 = vpack.c.b16 %v944, %v943
        %v989 = vpack.c.b16 %v946, %v945
        %v990 = vpack.c.b16 %v948, %v947
        %v991 = vpack.c.b16 %v950, %v949
        %v992 = vpack.c.b16 %v952, %v951
        %v993 = vpack.c.b16 %v954, %v953
        %v994 = vpack.c.b16 %v956, %v955
        %v995 = vpack.c.b16 %v958, %v957
        %v996 = vpack.c.b16 %v960, %v959
        %v997 = vpack.c.b16 %v962, %v961
        %v998 = vpack.c.b16 %v964, %v963
        %v999 = vpack.c.b16 %v966, %v965
        %v1000 = vpack.c.b16 %v968, %v967
        %v1001 = vpack.c.b16 %v970, %v969
        %v1002 = vpack.c.b16 %v972, %v971
        %v1003 = vpack.c.b16 %v974, %v973
        %v1004 = vpack.c.b16 %v976, %v975
        %v1005 = vpack.c.b16 %v978, %v977
        %v1006 = vpack.c.b16 %v980, %v979
        %v1007 = vpack.c.b16 %v982, %v981
        %v1008 = vpack.c.b16 %v984, %v983
        %1033 = vmatpush.bf16.msra.mxu0 %v992
        %1034 = vmatpush.bf16.msra.mxu0 %v991
        %1035 = vmatpush.bf16.msra.mxu0 %v990
        %1036 = vmatpush.bf16.msra.mxu0 %v989
        %1037 = vmatpush.bf16.msra.mxu0 %v988
        %1038 = vmatpush.bf16.msra.mxu0 %v987
        %1039 = vmatpush.bf16.msra.mxu0 %v986
        %1040 = vmatpush.bf16.msra.mxu0 %v985
        %1041 = vmatmul.bf16.gmra.mxu0 %v817
        %v1042 = vpop.f32.mrf.mxu0
        %v1043 = vadd.f32 0.0, %v1042
        %v1044 = vpop.f32.mrf.mxu0
        %v1045 = vadd.f32 0.0, %v1044
        %1046 = vmatmul.bf16.gmra.mxu0 %v820
        %v1047 = vpop.f32.mrf.mxu0
        %v1048 = vadd.f32 0.0, %v1047
        %v1049 = vpop.f32.mrf.mxu0
        %v1050 = vadd.f32 0.0, %v1049
        %1051 = vmatmul.bf16.gmra.mxu0 %v823
        %v1052 = vpop.f32.mrf.mxu0
        %v1053 = vadd.f32 0.0, %v1052
        %v1054 = vpop.f32.mrf.mxu0
        %v1055 = vadd.f32 0.0, %v1054
        %1056 = vmatmul.bf16.gmra.mxu0 %v826
        %v1057 = vpop.f32.mrf.mxu0
        %v1058 = vadd.f32 0.0, %v1057
        %v1059 = vpop.f32.mrf.mxu0
        %v1060 = vadd.f32 0.0, %v1059
        %1061 = vmatmul.bf16.gmra.mxu0 %v829
        %v1062 = vpop.f32.mrf.mxu0
        %v1063 = vadd.f32 0.0, %v1062
        %v1064 = vpop.f32.mrf.mxu0
        %v1065 = vadd.f32 0.0, %v1064
        %1066 = vmatmul.bf16.gmra.mxu0 %v832
        %v1067 = vpop.f32.mrf.mxu0
        %v1068 = vadd.f32 0.0, %v1067
        %v1069 = vpop.f32.mrf.mxu0
        %v1070 = vadd.f32 0.0, %v1069
        %1071 = vmatmul.bf16.gmra.mxu0 %v835
        %v1072 = vpop.f32.mrf.mxu0
        %v1073 = vadd.f32 0.0, %v1072
        %v1074 = vpop.f32.mrf.mxu0
        %v1075 = vadd.f32 0.0, %v1074
        %1076 = vmatmul.bf16.gmra.mxu0 %v838
        %v1077 = vpop.f32.mrf.mxu0
        %v1078 = vadd.f32 0.0, %v1077
        %v1079 = vpop.f32.mrf.mxu0
        %v1080 = vadd.f32 0.0, %v1079
        %1081 = vmatmul.bf16.gmra.mxu0 %v841
        %v1082 = vpop.f32.mrf.mxu0
        %v1083 = vadd.f32 0.0, %v1082
        %v1084 = vpop.f32.mrf.mxu0
        %v1085 = vadd.f32 0.0, %v1084
        %1086 = vmatmul.bf16.gmra.mxu0 %v844
        %v1087 = vpop.f32.mrf.mxu0
        %v1088 = vadd.f32 0.0, %v1087
        %v1089 = vpop.f32.mrf.mxu0
        %v1090 = vadd.f32 0.0, %v1089
        %1091 = vmatmul.bf16.gmra.mxu0 %v847
        %v1092 = vpop.f32.mrf.mxu0
        %v1093 = vadd.f32 0.0, %v1092
        %v1094 = vpop.f32.mrf.mxu0
        %v1095 = vadd.f32 0.0, %v1094
        %1096 = vmatmul.bf16.gmra.mxu0 %v850
        %v1097 = vpop.f32.mrf.mxu0
        %v1098 = vadd.f32 0.0, %v1097
        %v1099 = vpop.f32.mrf.mxu0
        %v1100 = vadd.f32 0.0, %v1099
        %1101 = vmatmul.bf16.gmra.mxu0 %v853
        %v1102 = vpop.f32.mrf.mxu0
        %v1103 = vadd.f32 0.0, %v1102
        %v1104 = vpop.f32.mrf.mxu0
        %v1105 = vadd.f32 0.0, %v1104
        %1106 = vmatmul.bf16.gmra.mxu0 %v856
        %v1107 = vpop.f32.mrf.mxu0
        %v1108 = vadd.f32 0.0, %v1107
        %v1109 = vpop.f32.mrf.mxu0
        %v1110 = vadd.f32 0.0, %v1109
        %1111 = vmatmul.bf16.gmra.mxu0 %v859
        %v1112 = vpop.f32.mrf.mxu0
        %v1113 = vadd.f32 0.0, %v1112
        %v1114 = vpop.f32.mrf.mxu0
        %v1115 = vadd.f32 0.0, %v1114
        %1116 = vmatmul.bf16.gmra.mxu0 %v862
        %v1117 = vpop.f32.mrf.mxu0
        %v1118 = vadd.f32 0.0, %v1117
        %v1119 = vpop.f32.mrf.mxu0
        %v1120 = vadd.f32 0.0, %v1119
        %1121 = vmatmul.bf16.gmra.mxu0 %v865
        %v1122 = vpop.f32.mrf.mxu0
        %v1123 = vadd.f32 0.0, %v1122
        %v1124 = vpop.f32.mrf.mxu0
        %v1125 = vadd.f32 0.0, %v1124
        %1126 = vmatmul.bf16.gmra.mxu0 %v868
        %v1127 = vpop.f32.mrf.mxu0
        %v1128 = vadd.f32 0.0, %v1127
        %v1129 = vpop.f32.mrf.mxu0
        %v1130 = vadd.f32 0.0, %v1129
        %1131 = vmatmul.bf16.gmra.mxu0 %v871
        %v1132 = vpop.f32.mrf.mxu0
        %v1133 = vadd.f32 0.0, %v1132
        %v1134 = vpop.f32.mrf.mxu0
        %v1135 = vadd.f32 0.0, %v1134
        %1136 = vmatmul.bf16.gmra.mxu0 %v874
        %v1137 = vpop.f32.mrf.mxu0
        %v1138 = vadd.f32 0.0, %v1137
        %v1139 = vpop.f32.mrf.mxu0
        %v1140 = vadd.f32 0.0, %v1139
        %1141 = vmatmul.bf16.gmra.mxu0 %v877
        %v1142 = vpop.f32.mrf.mxu0
        %v1143 = vadd.f32 0.0, %v1142
        %v1144 = vpop.f32.mrf.mxu0
        %v1145 = vadd.f32 0.0, %v1144
        %1146 = vmatmul.bf16.gmra.mxu0 %v880
        %v1147 = vpop.f32.mrf.mxu0
        %v1148 = vadd.f32 0.0, %v1147
        %v1149 = vpop.f32.mrf.mxu0
        %v1150 = vadd.f32 0.0, %v1149
        %1151 = vmatmul.bf16.gmra.mxu0 %v883
        %v1152 = vpop.f32.mrf.mxu0
        %v1153 = vadd.f32 0.0, %v1152
        %v1154 = vpop.f32.mrf.mxu0
        %v1155 = vadd.f32 0.0, %v1154
        %1156 = vmatmul.bf16.gmra.mxu0 %v886
        %v1157 = vpop.f32.mrf.mxu0
        %v1158 = vadd.f32 0.0, %v1157
        %v1159 = vpop.f32.mrf.mxu0
        %v1160 = vadd.f32 0.0, %v1159
        %1161 = vdwg.mxu0
        %1162 = vmatpush.bf16.msra.mxu0 %v1000
        %1163 = vmatpush.bf16.msra.mxu0 %v999
        %1164 = vmatpush.bf16.msra.mxu0 %v998
        %1165 = vmatpush.bf16.msra.mxu0 %v997
        %1166 = vmatpush.bf16.msra.mxu0 %v996
        %1167 = vmatpush.bf16.msra.mxu0 %v995
        %1168 = vmatpush.bf16.msra.mxu0 %v994
        %1169 = vmatpush.bf16.msra.mxu0 %v993
        %1170 = vmatmul.bf16.gmra.mxu0 %v818
        %v1171 = vpop.f32.mrf.mxu0
        %v1172 = vadd.f32 %v1043, %v1171
        %v1173 = vpop.f32.mrf.mxu0
        %v1174 = vadd.f32 %v1045, %v1173
        %1175 = vmatmul.bf16.gmra.mxu0 %v821
        %v1176 = vpop.f32.mrf.mxu0
        %v1177 = vadd.f32 %v1048, %v1176
        %v1178 = vpop.f32.mrf.mxu0
        %v1179 = vadd.f32 %v1050, %v1178
        %1180 = vmatmul.bf16.gmra.mxu0 %v824
        %v1181 = vpop.f32.mrf.mxu0
        %v1182 = vadd.f32 %v1053, %v1181
        %v1183 = vpop.f32.mrf.mxu0
        %v1184 = vadd.f32 %v1055, %v1183
        %1185 = vmatmul.bf16.gmra.mxu0 %v827
        %v1186 = vpop.f32.mrf.mxu0
        %v1187 = vadd.f32 %v1058, %v1186
        %v1188 = vpop.f32.mrf.mxu0
        %v1189 = vadd.f32 %v1060, %v1188
        %1190 = vmatmul.bf16.gmra.mxu0 %v830
        %v1191 = vpop.f32.mrf.mxu0
        %v1192 = vadd.f32 %v1063, %v1191
        %v1193 = vpop.f32.mrf.mxu0
        %v1194 = vadd.f32 %v1065, %v1193
        %1195 = vmatmul.bf16.gmra.mxu0 %v833
        %v1196 = vpop.f32.mrf.mxu0
        %v1197 = vadd.f32 %v1068, %v1196
        %v1198 = vpop.f32.mrf.mxu0
        %v1199 = vadd.f32 %v1070, %v1198
        %1200 = vmatmul.bf16.gmra.mxu0 %v836
        %v1201 = vpop.f32.mrf.mxu0
        %v1202 = vadd.f32 %v1073, %v1201
        %v1203 = vpop.f32.mrf.mxu0
        %v1204 = vadd.f32 %v1075, %v1203
        %1205 = vmatmul.bf16.gmra.mxu0 %v839
        %v1206 = vpop.f32.mrf.mxu0
        %v1207 = vadd.f32 %v1078, %v1206
        %v1208 = vpop.f32.mrf.mxu0
        %v1209 = vadd.f32 %v1080, %v1208
        %1210 = vmatmul.bf16.gmra.mxu0 %v842
        %v1211 = vpop.f32.mrf.mxu0
        %v1212 = vadd.f32 %v1083, %v1211
        %v1213 = vpop.f32.mrf.mxu0
        %v1214 = vadd.f32 %v1085, %v1213
        %1215 = vmatmul.bf16.gmra.mxu0 %v845
        %v1216 = vpop.f32.mrf.mxu0
        %v1217 = vadd.f32 %v1088, %v1216
        %v1218 = vpop.f32.mrf.mxu0
        %v1219 = vadd.f32 %v1090, %v1218
        %1220 = vmatmul.bf16.gmra.mxu0 %v848
        %v1221 = vpop.f32.mrf.mxu0
        %v1222 = vadd.f32 %v1093, %v1221
        %v1223 = vpop.f32.mrf.mxu0
        %v1224 = vadd.f32 %v1095, %v1223
        %1225 = vmatmul.bf16.gmra.mxu0 %v851
        %v1226 = vpop.f32.mrf.mxu0
        %v1227 = vadd.f32 %v1098, %v1226
        %v1228 = vpop.f32.mrf.mxu0
        %v1229 = vadd.f32 %v1100, %v1228
        %1230 = vmatmul.bf16.gmra.mxu0 %v854
        %v1231 = vpop.f32.mrf.mxu0
        %v1232 = vadd.f32 %v1103, %v1231
        %v1233 = vpop.f32.mrf.mxu0
        %v1234 = vadd.f32 %v1105, %v1233
        %1235 = vmatmul.bf16.gmra.mxu0 %v857
        %v1236 = vpop.f32.mrf.mxu0
        %v1237 = vadd.f32 %v1108, %v1236
        %v1238 = vpop.f32.mrf.mxu0
        %v1239 = vadd.f32 %v1110, %v1238
        %1240 = vmatmul.bf16.gmra.mxu0 %v860
        %v1241 = vpop.f32.mrf.mxu0
        %v1242 = vadd.f32 %v1113, %v1241
        %v1243 = vpop.f32.mrf.mxu0
        %v1244 = vadd.f32 %v1115, %v1243
        %1245 = vmatmul.bf16.gmra.mxu0 %v863
        %v1246 = vpop.f32.mrf.mxu0
        %v1247 = vadd.f32 %v1118, %v1246
        %v1248 = vpop.f32.mrf.mxu0
        %v1249 = vadd.f32 %v1120, %v1248
        %1250 = vmatmul.bf16.gmra.mxu0 %v866
        %v1251 = vpop.f32.mrf.mxu0
        %v1252 = vadd.f32 %v1123, %v1251
        %v1253 = vpop.f32.mrf.mxu0
        %v1254 = vadd.f32 %v1125, %v1253
        %1255 = vmatmul.bf16.gmra.mxu0 %v869
        %v1256 = vpop.f32.mrf.mxu0
        %v1257 = vadd.f32 %v1128, %v1256
        %v1258 = vpop.f32.mrf.mxu0
        %v1259 = vadd.f32 %v1130, %v1258
        %1260 = vmatmul.bf16.gmra.mxu0 %v872
        %v1261 = vpop.f32.mrf.mxu0
        %v1262 = vadd.f32 %v1133, %v1261
        %v1263 = vpop.f32.mrf.mxu0
        %v1264 = vadd.f32 %v1135, %v1263
        %1265 = vmatmul.bf16.gmra.mxu0 %v875
        %v1266 = vpop.f32.mrf.mxu0
        %v1267 = vadd.f32 %v1138, %v1266
        %v1268 = vpop.f32.mrf.mxu0
        %v1269 = vadd.f32 %v1140, %v1268
        %1270 = vmatmul.bf16.gmra.mxu0 %v878
        %v1271 = vpop.f32.mrf.mxu0
        %v1272 = vadd.f32 %v1143, %v1271
        %v1273 = vpop.f32.mrf.mxu0
        %v1274 = vadd.f32 %v1145, %v1273
        %1275 = vmatmul.bf16.gmra.mxu0 %v881
        %v1276 = vpop.f32.mrf.mxu0
        %v1277 = vadd.f32 %v1148, %v1276
        %v1278 = vpop.f32.mrf.mxu0
        %v1279 = vadd.f32 %v1150, %v1278
        %1280 = vmatmul.bf16.gmra.mxu0 %v884
        %v1281 = vpop.f32.mrf.mxu0
        %v1282 = vadd.f32 %v1153, %v1281
        %v1283 = vpop.f32.mrf.mxu0
        %v1284 = vadd.f32 %v1155, %v1283
        %1285 = vmatmul.bf16.gmra.mxu0 %v887
        %v1286 = vpop.f32.mrf.mxu0
        %v1287 = vadd.f32 %v1158, %v1286
        %v1288 = vpop.f32.mrf.mxu0
        %v1289 = vadd.f32 %v1160, %v1288
        %1290 = vdwg.mxu0
        %1291 = vmatpush.bf16.msra.mxu0 %v1008
        %1292 = vmatpush.bf16.msra.mxu0 %v1007
        %1293 = vmatpush.bf16.msra.mxu0 %v1006
        %1294 = vmatpush.bf16.msra.mxu0 %v1005
        %1295 = vmatpush.bf16.msra.mxu0 %v1004
        %1296 = vmatpush.bf16.msra.mxu0 %v1003
        %1297 = vmatpush.bf16.msra.mxu0 %v1002
        %1298 = vmatpush.bf16.msra.mxu0 %v1001
        %1299 = vmatmul.bf16.gmra.mxu0 %v819
        %v1300 = vpop.f32.mrf.mxu0
        %v1301 = vadd.f32 %v1172, %v1300
        %v1302 = vpop.f32.mrf.mxu0
        %v1303 = vadd.f32 %v1174, %v1302
        %1304 = vmatmul.bf16.gmra.mxu0 %v822
        %v1305 = vpop.f32.mrf.mxu0
        %v1306 = vadd.f32 %v1177, %v1305
        %v1307 = vpop.f32.mrf.mxu0
        %v1308 = vadd.f32 %v1179, %v1307
        %1309 = vmatmul.bf16.gmra.mxu0 %v825
        %v1310 = vpop.f32.mrf.mxu0
        %v1311 = vadd.f32 %v1182, %v1310
        %v1312 = vpop.f32.mrf.mxu0
        %v1313 = vadd.f32 %v1184, %v1312
        %1314 = vmatmul.bf16.gmra.mxu0 %v828
        %v1315 = vpop.f32.mrf.mxu0
        %v1316 = vadd.f32 %v1187, %v1315
        %v1317 = vpop.f32.mrf.mxu0
        %v1318 = vadd.f32 %v1189, %v1317
        %1319 = vmatmul.bf16.gmra.mxu0 %v831
        %v1320 = vpop.f32.mrf.mxu0
        %v1321 = vadd.f32 %v1192, %v1320
        %v1322 = vpop.f32.mrf.mxu0
        %v1323 = vadd.f32 %v1194, %v1322
        %1324 = vmatmul.bf16.gmra.mxu0 %v834
        %v1325 = vpop.f32.mrf.mxu0
        %v1326 = vadd.f32 %v1197, %v1325
        %v1327 = vpop.f32.mrf.mxu0
        %v1328 = vadd.f32 %v1199, %v1327
        %1329 = vmatmul.bf16.gmra.mxu0 %v837
        %v1330 = vpop.f32.mrf.mxu0
        %v1331 = vadd.f32 %v1202, %v1330
        %v1332 = vpop.f32.mrf.mxu0
        %v1333 = vadd.f32 %v1204, %v1332
        %1334 = vmatmul.bf16.gmra.mxu0 %v840
        %v1335 = vpop.f32.mrf.mxu0
        %v1336 = vadd.f32 %v1207, %v1335
        %v1337 = vpop.f32.mrf.mxu0
        %v1338 = vadd.f32 %v1209, %v1337
        %1339 = vmatmul.bf16.gmra.mxu0 %v843
        %v1340 = vpop.f32.mrf.mxu0
        %v1341 = vadd.f32 %v1212, %v1340
        %v1342 = vpop.f32.mrf.mxu0
        %v1343 = vadd.f32 %v1214, %v1342
        %1344 = vmatmul.bf16.gmra.mxu0 %v846
        %v1345 = vpop.f32.mrf.mxu0
        %v1346 = vadd.f32 %v1217, %v1345
        %v1347 = vpop.f32.mrf.mxu0
        %v1348 = vadd.f32 %v1219, %v1347
        %1349 = vmatmul.bf16.gmra.mxu0 %v849
        %v1350 = vpop.f32.mrf.mxu0
        %v1351 = vadd.f32 %v1222, %v1350
        %v1352 = vpop.f32.mrf.mxu0
        %v1353 = vadd.f32 %v1224, %v1352
        %1354 = vmatmul.bf16.gmra.mxu0 %v852
        %v1355 = vpop.f32.mrf.mxu0
        %v1356 = vadd.f32 %v1227, %v1355
        %v1357 = vpop.f32.mrf.mxu0
        %v1358 = vadd.f32 %v1229, %v1357
        %1359 = vmatmul.bf16.gmra.mxu0 %v855
        %v1360 = vpop.f32.mrf.mxu0
        %v1361 = vadd.f32 %v1232, %v1360
        %v1362 = vpop.f32.mrf.mxu0
        %v1363 = vadd.f32 %v1234, %v1362
        %1364 = vmatmul.bf16.gmra.mxu0 %v858
        %v1365 = vpop.f32.mrf.mxu0
        %v1366 = vadd.f32 %v1237, %v1365
        %v1367 = vpop.f32.mrf.mxu0
        %v1368 = vadd.f32 %v1239, %v1367
        %1369 = vmatmul.bf16.gmra.mxu0 %v861
        %v1370 = vpop.f32.mrf.mxu0
        %v1371 = vadd.f32 %v1242, %v1370
        %v1372 = vpop.f32.mrf.mxu0
        %v1373 = vadd.f32 %v1244, %v1372
        %1374 = vmatmul.bf16.gmra.mxu0 %v864
        %v1375 = vpop.f32.mrf.mxu0
        %v1376 = vadd.f32 %v1247, %v1375
        %v1377 = vpop.f32.mrf.mxu0
        %v1378 = vadd.f32 %v1249, %v1377
        %1379 = vmatmul.bf16.gmra.mxu0 %v867
        %v1380 = vpop.f32.mrf.mxu0
        %v1381 = vadd.f32 %v1252, %v1380
        %v1382 = vpop.f32.mrf.mxu0
        %v1383 = vadd.f32 %v1254, %v1382
        %1384 = vmatmul.bf16.gmra.mxu0 %v870
        %v1385 = vpop.f32.mrf.mxu0
        %v1386 = vadd.f32 %v1257, %v1385
        %v1387 = vpop.f32.mrf.mxu0
        %v1388 = vadd.f32 %v1259, %v1387
        %1389 = vmatmul.bf16.gmra.mxu0 %v873
        %v1390 = vpop.f32.mrf.mxu0
        %v1391 = vadd.f32 %v1262, %v1390
        %v1392 = vpop.f32.mrf.mxu0
        %v1393 = vadd.f32 %v1264, %v1392
        %1394 = vmatmul.bf16.gmra.mxu0 %v876
        %v1395 = vpop.f32.mrf.mxu0
        %v1396 = vadd.f32 %v1267, %v1395
        %v1397 = vpop.f32.mrf.mxu0
        %v1398 = vadd.f32 %v1269, %v1397
        %1399 = vmatmul.bf16.gmra.mxu0 %v879
        %v1400 = vpop.f32.mrf.mxu0
        %v1401 = vadd.f32 %v1272, %v1400
        %v1402 = vpop.f32.mrf.mxu0
        %v1403 = vadd.f32 %v1274, %v1402
        %1404 = vmatmul.bf16.gmra.mxu0 %v882
        %v1405 = vpop.f32.mrf.mxu0
        %v1406 = vadd.f32 %v1277, %v1405
        %v1407 = vpop.f32.mrf.mxu0
        %v1408 = vadd.f32 %v1279, %v1407
        %1409 = vmatmul.bf16.gmra.mxu0 %v885
        %v1410 = vpop.f32.mrf.mxu0
        %v1411 = vadd.f32 %v1282, %v1410
        %v1412 = vpop.f32.mrf.mxu0
        %v1413 = vadd.f32 %v1284, %v1412
        %1414 = vmatmul.bf16.gmra.mxu0 %v888
        %v1415 = vpop.f32.mrf.mxu0
        %v1416 = vadd.f32 %v1287, %v1415
        %v1417 = vpop.f32.mrf.mxu0
        %v1418 = vadd.f32 %v1289, %v1417
        %1419 = vdwg.mxu0
        %v1420 = vld [vmem:[%s1] sm:$0xff]
        %v1421 = vld [vmem:[%s1 + $0x8] sm:$0xff]
        %v1422 = vld [vmem:[%s1 + $0x10] sm:$0xff]
        %v1423 = vld [vmem:[%s1 + $0x18] sm:$0xff]
        %v1424 = vld [vmem:[%s1 + $0x20] sm:$0xff]
        %v1425 = vld [vmem:[%s1 + $0x28] sm:$0xff]
        %v1426 = vld [vmem:[%s1 + $0x30] sm:$0xff]
        %v1427 = vld [vmem:[%s1 + $0x38] sm:$0xff]
        %v1428 = vld [vmem:[%s1 + $0x40] sm:$0xff]
        %v1429 = vld [vmem:[%s1 + $0x48] sm:$0xff]
        %v1430 = vld [vmem:[%s1 + $0x50] sm:$0xff]
        %v1431 = vld [vmem:[%s1 + $0x58] sm:$0xff]
        %v1432 = vld [vmem:[%s1 + $0x60] sm:$0xff]
        %v1433 = vld [vmem:[%s1 + $0x68] sm:$0xff]
        %v1434 = vld [vmem:[%s1 + $0x70] sm:$0xff]
        %v1435 = vld [vmem:[%s1 + $0x78] sm:$0xff]
        %v1436 = vld [vmem:[%s1 + $0x80] sm:$0xff]
        %v1437 = vld [vmem:[%s1 + $0x88] sm:$0xff]
        %v1438 = vld [vmem:[%s1 + $0x90] sm:$0xff]
        %v1439 = vld [vmem:[%s1 + $0x98] sm:$0xff]
        %v1440 = vld [vmem:[%s1 + $0xa0] sm:$0xff]
        %v1441 = vld [vmem:[%s1 + $0xa8] sm:$0xff]
        %v1442 = vld [vmem:[%s1 + $0xb0] sm:$0xff]
        %v1443 = vld [vmem:[%s1 + $0xb8] sm:$0xff]
        %v1444 = vld [vmem:[%s1 + $0xc0] sm:$0xff]
        %v1445 = vld [vmem:[%s1 + $0xc8] sm:$0xff]
        %v1446 = vld [vmem:[%s1 + $0xd0] sm:$0xff]
        %v1447 = vld [vmem:[%s1 + $0xd8] sm:$0xff]
        %v1448 = vld [vmem:[%s1 + $0xe0] sm:$0xff]
        %v1449 = vld [vmem:[%s1 + $0xe8] sm:$0xff]
        %v1450 = vld [vmem:[%s1 + $0xf0] sm:$0xff]
        %v1451 = vld [vmem:[%s1 + $0xf8] sm:$0xff]
        %v1452 = vld [vmem:[%s1 + $0x100] sm:$0xff]
        %v1453 = vld [vmem:[%s1 + $0x108] sm:$0xff]
        %v1454 = vld [vmem:[%s1 + $0x110] sm:$0xff]
        %v1455 = vld [vmem:[%s1 + $0x118] sm:$0xff]
        %v1456 = vld [vmem:[%s1 + $0x120] sm:$0xff]
        %v1457 = vld [vmem:[%s1 + $0x128] sm:$0xff]
        %v1458 = vld [vmem:[%s1 + $0x130] sm:$0xff]
        %v1459 = vld [vmem:[%s1 + $0x138] sm:$0xff]
        %v1460 = vld [vmem:[%s1 + $0x140] sm:$0xff]
        %v1461 = vld [vmem:[%s1 + $0x148] sm:$0xff]
        %v1462 = vld [vmem:[%s1 + $0x150] sm:$0xff]
        %v1463 = vld [vmem:[%s1 + $0x158] sm:$0xff]
        %v1464 = vld [vmem:[%s1 + $0x160] sm:$0xff]
        %v1465 = vld [vmem:[%s1 + $0x168] sm:$0xff]
        %v1466 = vld [vmem:[%s1 + $0x170] sm:$0xff]
        %v1467 = vld [vmem:[%s1 + $0x178] sm:$0xff]
        %1469 = vset.pattern.permute.xlu0 0
        %1470 = vperm.xlu0 %1469, %v1420
        %v1471 = vpop.permute.xlu0 %1470
        %1474 = vset.pattern.permute.xlu0 0
        %1475 = vperm.xlu0 %1474, %v1421
        %v1476 = vpop.permute.xlu0 %1475
        %1479 = vset.pattern.permute.xlu0 0
        %1480 = vperm.xlu0 %1479, %v1422
        %v1481 = vpop.permute.xlu0 %1480
        %1484 = vset.pattern.permute.xlu0 0
        %1485 = vperm.xlu0 %1484, %v1423
        %v1486 = vpop.permute.xlu0 %1485
        %1489 = vset.pattern.permute.xlu0 0
        %1490 = vperm.xlu0 %1489, %v1424
        %v1491 = vpop.permute.xlu0 %1490
        %1494 = vset.pattern.permute.xlu0 0
        %1495 = vperm.xlu0 %1494, %v1425
        %v1496 = vpop.permute.xlu0 %1495
        %1499 = vset.pattern.permute.xlu0 0
        %1500 = vperm.xlu0 %1499, %v1426
        %v1501 = vpop.permute.xlu0 %1500
        %1504 = vset.pattern.permute.xlu0 0
        %1505 = vperm.xlu0 %1504, %v1427
        %v1506 = vpop.permute.xlu0 %1505
        %1509 = vset.pattern.permute.xlu0 0
        %1510 = vperm.xlu0 %1509, %v1428
        %v1511 = vpop.permute.xlu0 %1510
        %1514 = vset.pattern.permute.xlu0 0
        %1515 = vperm.xlu0 %1514, %v1429
        %v1516 = vpop.permute.xlu0 %1515
        %1519 = vset.pattern.permute.xlu0 0
        %1520 = vperm.xlu0 %1519, %v1430
        %v1521 = vpop.permute.xlu0 %1520
        %1524 = vset.pattern.permute.xlu0 0
        %1525 = vperm.xlu0 %1524, %v1431
        %v1526 = vpop.permute.xlu0 %1525
        %1529 = vset.pattern.permute.xlu0 0
        %1530 = vperm.xlu0 %1529, %v1432
        %v1531 = vpop.permute.xlu0 %1530
        %1534 = vset.pattern.permute.xlu0 0
        %1535 = vperm.xlu0 %1534, %v1433
        %v1536 = vpop.permute.xlu0 %1535
        %1539 = vset.pattern.permute.xlu0 0
        %1540 = vperm.xlu0 %1539, %v1434
        %v1541 = vpop.permute.xlu0 %1540
        %1544 = vset.pattern.permute.xlu0 0
        %1545 = vperm.xlu0 %1544, %v1435
        %v1546 = vpop.permute.xlu0 %1545
        %1549 = vset.pattern.permute.xlu0 0
        %1550 = vperm.xlu0 %1549, %v1436
        %v1551 = vpop.permute.xlu0 %1550
        %1554 = vset.pattern.permute.xlu0 0
        %1555 = vperm.xlu0 %1554, %v1437
        %v1556 = vpop.permute.xlu0 %1555
        %1559 = vset.pattern.permute.xlu0 0
        %1560 = vperm.xlu0 %1559, %v1438
        %v1561 = vpop.permute.xlu0 %1560
        %1564 = vset.pattern.permute.xlu0 0
        %1565 = vperm.xlu0 %1564, %v1439
        %v1566 = vpop.permute.xlu0 %1565
        %1569 = vset.pattern.permute.xlu0 0
        %1570 = vperm.xlu0 %1569, %v1440
        %v1571 = vpop.permute.xlu0 %1570
        %1574 = vset.pattern.permute.xlu0 0
        %1575 = vperm.xlu0 %1574, %v1441
        %v1576 = vpop.permute.xlu0 %1575
        %1579 = vset.pattern.permute.xlu0 0
        %1580 = vperm.xlu0 %1579, %v1442
        %v1581 = vpop.permute.xlu0 %1580
        %1584 = vset.pattern.permute.xlu0 0
        %1585 = vperm.xlu0 %1584, %v1443
        %v1586 = vpop.permute.xlu0 %1585
        %1589 = vset.pattern.permute.xlu0 0
        %1590 = vperm.xlu0 %1589, %v1444
        %v1591 = vpop.permute.xlu0 %1590
        %1594 = vset.pattern.permute.xlu0 0
        %1595 = vperm.xlu0 %1594, %v1445
        %v1596 = vpop.permute.xlu0 %1595
        %1599 = vset.pattern.permute.xlu0 0
        %1600 = vperm.xlu0 %1599, %v1446
        %v1601 = vpop.permute.xlu0 %1600
        %1604 = vset.pattern.permute.xlu0 0
        %1605 = vperm.xlu0 %1604, %v1447
        %v1606 = vpop.permute.xlu0 %1605
        %1609 = vset.pattern.permute.xlu0 0
        %1610 = vperm.xlu0 %1609, %v1448
        %v1611 = vpop.permute.xlu0 %1610
        %1614 = vset.pattern.permute.xlu0 0
        %1615 = vperm.xlu0 %1614, %v1449
        %v1616 = vpop.permute.xlu0 %1615
        %1619 = vset.pattern.permute.xlu0 0
        %1620 = vperm.xlu0 %1619, %v1450
        %v1621 = vpop.permute.xlu0 %1620
        %1624 = vset.pattern.permute.xlu0 0
        %1625 = vperm.xlu0 %1624, %v1451
        %v1626 = vpop.permute.xlu0 %1625
        %1629 = vset.pattern.permute.xlu0 0
        %1630 = vperm.xlu0 %1629, %v1452
        %v1631 = vpop.permute.xlu0 %1630
        %1634 = vset.pattern.permute.xlu0 0
        %1635 = vperm.xlu0 %1634, %v1453
        %v1636 = vpop.permute.xlu0 %1635
        %1639 = vset.pattern.permute.xlu0 0
        %1640 = vperm.xlu0 %1639, %v1454
        %v1641 = vpop.permute.xlu0 %1640
        %1644 = vset.pattern.permute.xlu0 0
        %1645 = vperm.xlu0 %1644, %v1455
        %v1646 = vpop.permute.xlu0 %1645
        %1649 = vset.pattern.permute.xlu0 0
        %1650 = vperm.xlu0 %1649, %v1456
        %v1651 = vpop.permute.xlu0 %1650
        %1654 = vset.pattern.permute.xlu0 0
        %1655 = vperm.xlu0 %1654, %v1457
        %v1656 = vpop.permute.xlu0 %1655
        %1659 = vset.pattern.permute.xlu0 0
        %1660 = vperm.xlu0 %1659, %v1458
        %v1661 = vpop.permute.xlu0 %1660
        %1664 = vset.pattern.permute.xlu0 0
        %1665 = vperm.xlu0 %1664, %v1459
        %v1666 = vpop.permute.xlu0 %1665
        %1669 = vset.pattern.permute.xlu0 0
        %1670 = vperm.xlu0 %1669, %v1460
        %v1671 = vpop.permute.xlu0 %1670
        %1674 = vset.pattern.permute.xlu0 0
        %1675 = vperm.xlu0 %1674, %v1461
        %v1676 = vpop.permute.xlu0 %1675
        %1679 = vset.pattern.permute.xlu0 0
        %1680 = vperm.xlu0 %1679, %v1462
        %v1681 = vpop.permute.xlu0 %1680
        %1684 = vset.pattern.permute.xlu0 0
        %1685 = vperm.xlu0 %1684, %v1463
        %v1686 = vpop.permute.xlu0 %1685
        %1689 = vset.pattern.permute.xlu0 0
        %1690 = vperm.xlu0 %1689, %v1464
        %v1691 = vpop.permute.xlu0 %1690
        %1694 = vset.pattern.permute.xlu0 0
        %1695 = vperm.xlu0 %1694, %v1465
        %v1696 = vpop.permute.xlu0 %1695
        %1699 = vset.pattern.permute.xlu0 0
        %1700 = vperm.xlu0 %1699, %v1466
        %v1701 = vpop.permute.xlu0 %1700
        %1704 = vset.pattern.permute.xlu0 0
        %1705 = vperm.xlu0 %1704, %v1467
        %v1706 = vpop.permute.xlu0 %1705
        %v1708 = vmul.f32 %v1301, %v1471
        %v1709 = vmul.f32 %v1303, %v1476
        %v1710 = vmul.f32 %v1306, %v1481
        %v1711 = vmul.f32 %v1308, %v1486
        %v1712 = vmul.f32 %v1311, %v1491
        %v1713 = vmul.f32 %v1313, %v1496
        %v1714 = vmul.f32 %v1316, %v1501
        %v1715 = vmul.f32 %v1318, %v1506
        %v1716 = vmul.f32 %v1321, %v1511
        %v1717 = vmul.f32 %v1323, %v1516
        %v1718 = vmul.f32 %v1326, %v1521
        %v1719 = vmul.f32 %v1328, %v1526
        %v1720 = vmul.f32 %v1331, %v1531
        %v1721 = vmul.f32 %v1333, %v1536
        %v1722 = vmul.f32 %v1336, %v1541
        %v1723 = vmul.f32 %v1338, %v1546
        %v1724 = vmul.f32 %v1341, %v1551
        %v1725 = vmul.f32 %v1343, %v1556
        %v1726 = vmul.f32 %v1346, %v1561
        %v1727 = vmul.f32 %v1348, %v1566
        %v1728 = vmul.f32 %v1351, %v1571
        %v1729 = vmul.f32 %v1353, %v1576
        %v1730 = vmul.f32 %v1356, %v1581
        %v1731 = vmul.f32 %v1358, %v1586
        %v1732 = vmul.f32 %v1361, %v1591
        %v1733 = vmul.f32 %v1363, %v1596
        %v1734 = vmul.f32 %v1366, %v1601
        %v1735 = vmul.f32 %v1368, %v1606
        %v1736 = vmul.f32 %v1371, %v1611
        %v1737 = vmul.f32 %v1373, %v1616
        %v1738 = vmul.f32 %v1376, %v1621
        %v1739 = vmul.f32 %v1378, %v1626
        %v1740 = vmul.f32 %v1381, %v1631
        %v1741 = vmul.f32 %v1383, %v1636
        %v1742 = vmul.f32 %v1386, %v1641
        %v1743 = vmul.f32 %v1388, %v1646
        %v1744 = vmul.f32 %v1391, %v1651
        %v1745 = vmul.f32 %v1393, %v1656
        %v1746 = vmul.f32 %v1396, %v1661
        %v1747 = vmul.f32 %v1398, %v1666
        %v1748 = vmul.f32 %v1401, %v1671
        %v1749 = vmul.f32 %v1403, %v1676
        %v1750 = vmul.f32 %v1406, %v1681
        %v1751 = vmul.f32 %v1408, %v1686
        %v1752 = vmul.f32 %v1411, %v1691
        %v1753 = vmul.f32 %v1413, %v1696
        %v1754 = vmul.f32 %v1416, %v1701
        %v1755 = vmul.f32 %v1418, %v1706
        %v1756 = vpack.c.bf16 %v1709, %v1708
        %v1757 = vpack.c.bf16 %v1711, %v1710
        %v1758 = vpack.c.bf16 %v1713, %v1712
        %v1759 = vpack.c.bf16 %v1715, %v1714
        %v1760 = vpack.c.bf16 %v1717, %v1716
        %v1761 = vpack.c.bf16 %v1719, %v1718
        %v1762 = vpack.c.bf16 %v1721, %v1720
        %v1763 = vpack.c.bf16 %v1723, %v1722
        %v1764 = vpack.c.bf16 %v1725, %v1724
        %v1765 = vpack.c.bf16 %v1727, %v1726
        %v1766 = vpack.c.bf16 %v1729, %v1728
        %v1767 = vpack.c.bf16 %v1731, %v1730
        %v1768 = vpack.c.bf16 %v1733, %v1732
        %v1769 = vpack.c.bf16 %v1735, %v1734
        %v1770 = vpack.c.bf16 %v1737, %v1736
        %v1771 = vpack.c.bf16 %v1739, %v1738
        %v1772 = vpack.c.bf16 %v1741, %v1740
        %v1773 = vpack.c.bf16 %v1743, %v1742
        %v1774 = vpack.c.bf16 %v1745, %v1744
        %v1775 = vpack.c.bf16 %v1747, %v1746
        %v1776 = vpack.c.bf16 %v1749, %v1748
        %v1777 = vpack.c.bf16 %v1751, %v1750
        %v1778 = vpack.c.bf16 %v1753, %v1752
        %v1779 = vpack.c.bf16 %v1755, %v1754
        %v1780 = vld [vmem:[%s284] sm:$0xf]
        %v1781 = vld [vmem:[%s284 + $0x4] sm:$0xf]
        %v1782 = vld [vmem:[%s284 + $0x8] sm:$0xf]
        %v1783 = vld [vmem:[%s284 + $0xc] sm:$0xf]
        %v1784 = vld [vmem:[%s284 + $0x10] sm:$0xf]
        %v1785 = vld [vmem:[%s284 + $0x14] sm:$0xf]
        %v1786 = vld [vmem:[%s284 + $0x18] sm:$0xf]
        %v1787 = vld [vmem:[%s284 + $0x1c] sm:$0xf]
        %v1788 = vld [vmem:[%s284 + $0x20] sm:$0xf]
        %v1789 = vld [vmem:[%s284 + $0x24] sm:$0xf]
        %v1790 = vld [vmem:[%s284 + $0x28] sm:$0xf]
        %v1791 = vld [vmem:[%s284 + $0x2c] sm:$0xf]
        %v1792 = vld [vmem:[%s284 + $0x30] sm:$0xf]
        %v1793 = vld [vmem:[%s284 + $0x34] sm:$0xf]
        %v1794 = vld [vmem:[%s284 + $0x38] sm:$0xf]
        %v1795 = vld [vmem:[%s284 + $0x3c] sm:$0xf]
        %v1796 = vld [vmem:[%s294] sm:$0xf]
        %v1797 = vld [vmem:[%s294 + $0x4] sm:$0xf]
        %v1798 = vld [vmem:[%s294 + $0x8] sm:$0xf]
        %v1799 = vld [vmem:[%s294 + $0xc] sm:$0xf]
        %v1800 = vld [vmem:[%s294 + $0x10] sm:$0xf]
        %v1801 = vld [vmem:[%s294 + $0x14] sm:$0xf]
        %v1802 = vld [vmem:[%s294 + $0x18] sm:$0xf]
        %v1803 = vld [vmem:[%s294 + $0x1c] sm:$0xf]
        %v1804 = vld [vmem:[%s294 + $0x20] sm:$0xf]
        %v1805 = vld [vmem:[%s294 + $0x24] sm:$0xf]
        %v1806 = vld [vmem:[%s294 + $0x28] sm:$0xf]
        %v1807 = vld [vmem:[%s294 + $0x2c] sm:$0xf]
        %v1808 = vld [vmem:[%s294 + $0x30] sm:$0xf]
        %v1809 = vld [vmem:[%s294 + $0x34] sm:$0xf]
        %v1810 = vld [vmem:[%s294 + $0x38] sm:$0xf]
        %v1811 = vld [vmem:[%s294 + $0x3c] sm:$0xf]
        %v1828 = vunpack.c.l.b16 %v1796
        %v1829 = vunpack.c.l.b16 %v1797
        %v1830 = vunpack.c.l.b16 %v1798
        %v1831 = vunpack.c.l.b16 %v1799
        %v1832 = vunpack.c.l.b16 %v1800
        %v1833 = vunpack.c.l.b16 %v1801
        %v1834 = vunpack.c.l.b16 %v1802
        %v1835 = vunpack.c.l.b16 %v1803
        %v1836 = vunpack.c.l.b16 %v1804
        %v1837 = vunpack.c.l.b16 %v1805
        %v1838 = vunpack.c.l.b16 %v1806
        %v1839 = vunpack.c.l.b16 %v1807
        %v1840 = vunpack.c.l.b16 %v1808
        %v1841 = vunpack.c.l.b16 %v1809
        %v1842 = vunpack.c.l.b16 %v1810
        %v1843 = vunpack.c.l.b16 %v1811
        %v1844 = vpack.c.b16 %v1829, %v1828
        %v1845 = vpack.c.b16 %v1831, %v1830
        %v1846 = vpack.c.b16 %v1833, %v1832
        %v1847 = vpack.c.b16 %v1835, %v1834
        %v1848 = vpack.c.b16 %v1837, %v1836
        %v1849 = vpack.c.b16 %v1839, %v1838
        %v1850 = vpack.c.b16 %v1841, %v1840
        %v1851 = vpack.c.b16 %v1843, %v1842
        %1860 = vmatpush.bf16.msra.mxu0 %v1851
        %1861 = vmatpush.bf16.msra.mxu0 %v1850
        %1862 = vmatpush.bf16.msra.mxu0 %v1849
        %1863 = vmatpush.bf16.msra.mxu0 %v1848
        %1864 = vmatpush.bf16.msra.mxu0 %v1847
        %1865 = vmatpush.bf16.msra.mxu0 %v1846
        %1866 = vmatpush.bf16.msra.mxu0 %v1845
        %1867 = vmatpush.bf16.msra.mxu0 %v1844
        %1868 = vmatmul.bf16.gmra.mxu0 %v985
        %v1869 = vpop.f32.mrf.mxu0
        %v1870 = vadd.f32 0.0, %v1869
        %v1871 = vpop.f32.mrf.mxu0
        %v1872 = vadd.f32 0.0, %v1871
        %1873 = vmatmul.bf16.gmra.mxu0 %v986
        %v1874 = vpop.f32.mrf.mxu0
        %v1875 = vadd.f32 0.0, %v1874
        %v1876 = vpop.f32.mrf.mxu0
        %v1877 = vadd.f32 0.0, %v1876
        %1878 = vmatmul.bf16.gmra.mxu0 %v987
        %v1879 = vpop.f32.mrf.mxu0
        %v1880 = vadd.f32 0.0, %v1879
        %v1881 = vpop.f32.mrf.mxu0
        %v1882 = vadd.f32 0.0, %v1881
        %1883 = vmatmul.bf16.gmra.mxu0 %v988
        %v1884 = vpop.f32.mrf.mxu0
        %v1885 = vadd.f32 0.0, %v1884
        %v1886 = vpop.f32.mrf.mxu0
        %v1887 = vadd.f32 0.0, %v1886
        %1888 = vmatmul.bf16.gmra.mxu0 %v989
        %v1889 = vpop.f32.mrf.mxu0
        %v1890 = vadd.f32 0.0, %v1889
        %v1891 = vpop.f32.mrf.mxu0
        %v1892 = vadd.f32 0.0, %v1891
        %1893 = vmatmul.bf16.gmra.mxu0 %v990
        %v1894 = vpop.f32.mrf.mxu0
        %v1895 = vadd.f32 0.0, %v1894
        %v1896 = vpop.f32.mrf.mxu0
        %v1897 = vadd.f32 0.0, %v1896
        %1898 = vmatmul.bf16.gmra.mxu0 %v991
        %v1899 = vpop.f32.mrf.mxu0
        %v1900 = vadd.f32 0.0, %v1899
        %v1901 = vpop.f32.mrf.mxu0
        %v1902 = vadd.f32 0.0, %v1901
        %1903 = vmatmul.bf16.gmra.mxu0 %v992
        %v1904 = vpop.f32.mrf.mxu0
        %v1905 = vadd.f32 0.0, %v1904
        %v1906 = vpop.f32.mrf.mxu0
        %v1907 = vadd.f32 0.0, %v1906
        %1908 = vmatmul.bf16.gmra.mxu0 %v993
        %v1909 = vpop.f32.mrf.mxu0
        %v1910 = vadd.f32 0.0, %v1909
        %v1911 = vpop.f32.mrf.mxu0
        %v1912 = vadd.f32 0.0, %v1911
        %1913 = vmatmul.bf16.gmra.mxu0 %v994
        %v1914 = vpop.f32.mrf.mxu0
        %v1915 = vadd.f32 0.0, %v1914
        %v1916 = vpop.f32.mrf.mxu0
        %v1917 = vadd.f32 0.0, %v1916
        %1918 = vmatmul.bf16.gmra.mxu0 %v995
        %v1919 = vpop.f32.mrf.mxu0
        %v1920 = vadd.f32 0.0, %v1919
        %v1921 = vpop.f32.mrf.mxu0
        %v1922 = vadd.f32 0.0, %v1921
        %1923 = vmatmul.bf16.gmra.mxu0 %v996
        %v1924 = vpop.f32.mrf.mxu0
        %v1925 = vadd.f32 0.0, %v1924
        %v1926 = vpop.f32.mrf.mxu0
        %v1927 = vadd.f32 0.0, %v1926
        %1928 = vmatmul.bf16.gmra.mxu0 %v997
        %v1929 = vpop.f32.mrf.mxu0
        %v1930 = vadd.f32 0.0, %v1929
        %v1931 = vpop.f32.mrf.mxu0
        %v1932 = vadd.f32 0.0, %v1931
        %1933 = vmatmul.bf16.gmra.mxu0 %v998
        %v1934 = vpop.f32.mrf.mxu0
        %v1935 = vadd.f32 0.0, %v1934
        %v1936 = vpop.f32.mrf.mxu0
        %v1937 = vadd.f32 0.0, %v1936
        %1938 = vmatmul.bf16.gmra.mxu0 %v999
        %v1939 = vpop.f32.mrf.mxu0
        %v1940 = vadd.f32 0.0, %v1939
        %v1941 = vpop.f32.mrf.mxu0
        %v1942 = vadd.f32 0.0, %v1941
        %1943 = vmatmul.bf16.gmra.mxu0 %v1000
        %v1944 = vpop.f32.mrf.mxu0
        %v1945 = vadd.f32 0.0, %v1944
        %v1946 = vpop.f32.mrf.mxu0
        %v1947 = vadd.f32 0.0, %v1946
        %1948 = vmatmul.bf16.gmra.mxu0 %v1001
        %v1949 = vpop.f32.mrf.mxu0
        %v1950 = vadd.f32 0.0, %v1949
        %v1951 = vpop.f32.mrf.mxu0
        %v1952 = vadd.f32 0.0, %v1951
        %1953 = vmatmul.bf16.gmra.mxu0 %v1002
        %v1954 = vpop.f32.mrf.mxu0
        %v1955 = vadd.f32 0.0, %v1954
        %v1956 = vpop.f32.mrf.mxu0
        %v1957 = vadd.f32 0.0, %v1956
        %1958 = vmatmul.bf16.gmra.mxu0 %v1003
        %v1959 = vpop.f32.mrf.mxu0
        %v1960 = vadd.f32 0.0, %v1959
        %v1961 = vpop.f32.mrf.mxu0
        %v1962 = vadd.f32 0.0, %v1961
        %1963 = vmatmul.bf16.gmra.mxu0 %v1004
        %v1964 = vpop.f32.mrf.mxu0
        %v1965 = vadd.f32 0.0, %v1964
        %v1966 = vpop.f32.mrf.mxu0
        %v1967 = vadd.f32 0.0, %v1966
        %1968 = vmatmul.bf16.gmra.mxu0 %v1005
        %v1969 = vpop.f32.mrf.mxu0
        %v1970 = vadd.f32 0.0, %v1969
        %v1971 = vpop.f32.mrf.mxu0
        %v1972 = vadd.f32 0.0, %v1971
        %1973 = vmatmul.bf16.gmra.mxu0 %v1006
        %v1974 = vpop.f32.mrf.mxu0
        %v1975 = vadd.f32 0.0, %v1974
        %v1976 = vpop.f32.mrf.mxu0
        %v1977 = vadd.f32 0.0, %v1976
        %1978 = vmatmul.bf16.gmra.mxu0 %v1007
        %v1979 = vpop.f32.mrf.mxu0
        %v1980 = vadd.f32 0.0, %v1979
        %v1981 = vpop.f32.mrf.mxu0
        %v1982 = vadd.f32 0.0, %v1981
        %1983 = vmatmul.bf16.gmra.mxu0 %v1008
        %v1984 = vpop.f32.mrf.mxu0
        %v1985 = vadd.f32 0.0, %v1984
        %v1986 = vpop.f32.mrf.mxu0
        %v1987 = vadd.f32 0.0, %v1986
        %1988 = vdwg.mxu0
        %v2005 = vunpack.c.l.b16 %v1780
        %v2006 = vunpack.c.l.b16 %v1781
        %v2007 = vunpack.c.l.b16 %v1782
        %v2008 = vunpack.c.l.b16 %v1783
        %v2009 = vunpack.c.l.b16 %v1784
        %v2010 = vunpack.c.l.b16 %v1785
        %v2011 = vunpack.c.l.b16 %v1786
        %v2012 = vunpack.c.l.b16 %v1787
        %v2013 = vunpack.c.l.b16 %v1788
        %v2014 = vunpack.c.l.b16 %v1789
        %v2015 = vunpack.c.l.b16 %v1790
        %v2016 = vunpack.c.l.b16 %v1791
        %v2017 = vunpack.c.l.b16 %v1792
        %v2018 = vunpack.c.l.b16 %v1793
        %v2019 = vunpack.c.l.b16 %v1794
        %v2020 = vunpack.c.l.b16 %v1795
        %v2021 = vpack.c.b16 %v2006, %v2005
        %v2022 = vpack.c.b16 %v2008, %v2007
        %v2023 = vpack.c.b16 %v2010, %v2009
        %v2024 = vpack.c.b16 %v2012, %v2011
        %v2025 = vpack.c.b16 %v2014, %v2013
        %v2026 = vpack.c.b16 %v2016, %v2015
        %v2027 = vpack.c.b16 %v2018, %v2017
        %v2028 = vpack.c.b16 %v2020, %v2019
        %2037 = vmatpush.bf16.msra.mxu0 %v2028
        %2038 = vmatpush.bf16.msra.mxu0 %v2027
        %2039 = vmatpush.bf16.msra.mxu0 %v2026
        %2040 = vmatpush.bf16.msra.mxu0 %v2025
        %2041 = vmatpush.bf16.msra.mxu0 %v2024
        %2042 = vmatpush.bf16.msra.mxu0 %v2023
        %2043 = vmatpush.bf16.msra.mxu0 %v2022
        %2044 = vmatpush.bf16.msra.mxu0 %v2021
        %2045 = vmatmul.bf16.gmra.mxu0 %v1756
        %v2046 = vpop.f32.mrf.mxu0
        %v2047 = vadd.f32 %v1870, %v2046
        %v2048 = vpop.f32.mrf.mxu0
        %v2049 = vadd.f32 %v1872, %v2048
        %2050 = vmatmul.bf16.gmra.mxu0 %v1757
        %v2051 = vpop.f32.mrf.mxu0
        %v2052 = vadd.f32 %v1875, %v2051
        %v2053 = vpop.f32.mrf.mxu0
        %v2054 = vadd.f32 %v1877, %v2053
        %2055 = vmatmul.bf16.gmra.mxu0 %v1758
        %v2056 = vpop.f32.mrf.mxu0
        %v2057 = vadd.f32 %v1880, %v2056
        %v2058 = vpop.f32.mrf.mxu0
        %v2059 = vadd.f32 %v1882, %v2058
        %2060 = vmatmul.bf16.gmra.mxu0 %v1759
        %v2061 = vpop.f32.mrf.mxu0
        %v2062 = vadd.f32 %v1885, %v2061
        %v2063 = vpop.f32.mrf.mxu0
        %v2064 = vadd.f32 %v1887, %v2063
        %2065 = vmatmul.bf16.gmra.mxu0 %v1760
        %v2066 = vpop.f32.mrf.mxu0
        %v2067 = vadd.f32 %v1890, %v2066
        %v2068 = vpop.f32.mrf.mxu0
        %v2069 = vadd.f32 %v1892, %v2068
        %2070 = vmatmul.bf16.gmra.mxu0 %v1761
        %v2071 = vpop.f32.mrf.mxu0
        %v2072 = vadd.f32 %v1895, %v2071
        %v2073 = vpop.f32.mrf.mxu0
        %v2074 = vadd.f32 %v1897, %v2073
        %2075 = vmatmul.bf16.gmra.mxu0 %v1762
        %v2076 = vpop.f32.mrf.mxu0
        %v2077 = vadd.f32 %v1900, %v2076
        %v2078 = vpop.f32.mrf.mxu0
        %v2079 = vadd.f32 %v1902, %v2078
        %2080 = vmatmul.bf16.gmra.mxu0 %v1763
        %v2081 = vpop.f32.mrf.mxu0
        %v2082 = vadd.f32 %v1905, %v2081
        %v2083 = vpop.f32.mrf.mxu0
        %v2084 = vadd.f32 %v1907, %v2083
        %2085 = vmatmul.bf16.gmra.mxu0 %v1764
        %v2086 = vpop.f32.mrf.mxu0
        %v2087 = vadd.f32 %v1910, %v2086
        %v2088 = vpop.f32.mrf.mxu0
        %v2089 = vadd.f32 %v1912, %v2088
        %2090 = vmatmul.bf16.gmra.mxu0 %v1765
        %v2091 = vpop.f32.mrf.mxu0
        %v2092 = vadd.f32 %v1915, %v2091
        %v2093 = vpop.f32.mrf.mxu0
        %v2094 = vadd.f32 %v1917, %v2093
        %2095 = vmatmul.bf16.gmra.mxu0 %v1766
        %v2096 = vpop.f32.mrf.mxu0
        %v2097 = vadd.f32 %v1920, %v2096
        %v2098 = vpop.f32.mrf.mxu0
        %v2099 = vadd.f32 %v1922, %v2098
        %2100 = vmatmul.bf16.gmra.mxu0 %v1767
        %v2101 = vpop.f32.mrf.mxu0
        %v2102 = vadd.f32 %v1925, %v2101
        %v2103 = vpop.f32.mrf.mxu0
        %v2104 = vadd.f32 %v1927, %v2103
        %2105 = vmatmul.bf16.gmra.mxu0 %v1768
        %v2106 = vpop.f32.mrf.mxu0
        %v2107 = vadd.f32 %v1930, %v2106
        %v2108 = vpop.f32.mrf.mxu0
        %v2109 = vadd.f32 %v1932, %v2108
        %2110 = vmatmul.bf16.gmra.mxu0 %v1769
        %v2111 = vpop.f32.mrf.mxu0
        %v2112 = vadd.f32 %v1935, %v2111
        %v2113 = vpop.f32.mrf.mxu0
        %v2114 = vadd.f32 %v1937, %v2113
        %2115 = vmatmul.bf16.gmra.mxu0 %v1770
        %v2116 = vpop.f32.mrf.mxu0
        %v2117 = vadd.f32 %v1940, %v2116
        %v2118 = vpop.f32.mrf.mxu0
        %v2119 = vadd.f32 %v1942, %v2118
        %2120 = vmatmul.bf16.gmra.mxu0 %v1771
        %v2121 = vpop.f32.mrf.mxu0
        %v2122 = vadd.f32 %v1945, %v2121
        %v2123 = vpop.f32.mrf.mxu0
        %v2124 = vadd.f32 %v1947, %v2123
        %2125 = vmatmul.bf16.gmra.mxu0 %v1772
        %v2126 = vpop.f32.mrf.mxu0
        %v2127 = vadd.f32 %v1950, %v2126
        %v2128 = vpop.f32.mrf.mxu0
        %v2129 = vadd.f32 %v1952, %v2128
        %2130 = vmatmul.bf16.gmra.mxu0 %v1773
        %v2131 = vpop.f32.mrf.mxu0
        %v2132 = vadd.f32 %v1955, %v2131
        %v2133 = vpop.f32.mrf.mxu0
        %v2134 = vadd.f32 %v1957, %v2133
        %2135 = vmatmul.bf16.gmra.mxu0 %v1774
        %v2136 = vpop.f32.mrf.mxu0
        %v2137 = vadd.f32 %v1960, %v2136
        %v2138 = vpop.f32.mrf.mxu0
        %v2139 = vadd.f32 %v1962, %v2138
        %2140 = vmatmul.bf16.gmra.mxu0 %v1775
        %v2141 = vpop.f32.mrf.mxu0
        %v2142 = vadd.f32 %v1965, %v2141
        %v2143 = vpop.f32.mrf.mxu0
        %v2144 = vadd.f32 %v1967, %v2143
        %2145 = vmatmul.bf16.gmra.mxu0 %v1776
        %v2146 = vpop.f32.mrf.mxu0
        %v2147 = vadd.f32 %v1970, %v2146
        %v2148 = vpop.f32.mrf.mxu0
        %v2149 = vadd.f32 %v1972, %v2148
        %2150 = vmatmul.bf16.gmra.mxu0 %v1777
        %v2151 = vpop.f32.mrf.mxu0
        %v2152 = vadd.f32 %v1975, %v2151
        %v2153 = vpop.f32.mrf.mxu0
        %v2154 = vadd.f32 %v1977, %v2153
        %2155 = vmatmul.bf16.gmra.mxu0 %v1778
        %v2156 = vpop.f32.mrf.mxu0
        %v2157 = vadd.f32 %v1980, %v2156
        %v2158 = vpop.f32.mrf.mxu0
        %v2159 = vadd.f32 %v1982, %v2158
        %2160 = vmatmul.bf16.gmra.mxu0 %v1779
        %v2161 = vpop.f32.mrf.mxu0
        %v2162 = vadd.f32 %v1985, %v2161
        %v2163 = vpop.f32.mrf.mxu0
        %v2164 = vadd.f32 %v1987, %v2163
        %2165 = vdwg.mxu0
        %v2166 = vld [vmem:[%s329] sm:$0x1]
        %v2168 = vperm.slane %v2166, 0
        %v2170 = vadd.f32 %v2047, %v2168
        %v2171 = vadd.f32 %v2049, %v2168
        %v2172 = vadd.f32 %v2052, %v2168
        %v2173 = vadd.f32 %v2054, %v2168
        %v2174 = vadd.f32 %v2057, %v2168
        %v2175 = vadd.f32 %v2059, %v2168
        %v2176 = vadd.f32 %v2062, %v2168
        %v2177 = vadd.f32 %v2064, %v2168
        %v2178 = vadd.f32 %v2067, %v2168
        %v2179 = vadd.f32 %v2069, %v2168
        %v2180 = vadd.f32 %v2072, %v2168
        %v2181 = vadd.f32 %v2074, %v2168
        %v2182 = vadd.f32 %v2077, %v2168
        %v2183 = vadd.f32 %v2079, %v2168
        %v2184 = vadd.f32 %v2082, %v2168
        %v2185 = vadd.f32 %v2084, %v2168
        %v2186 = vadd.f32 %v2087, %v2168
        %v2187 = vadd.f32 %v2089, %v2168
        %v2188 = vadd.f32 %v2092, %v2168
        %v2189 = vadd.f32 %v2094, %v2168
        %v2190 = vadd.f32 %v2097, %v2168
        %v2191 = vadd.f32 %v2099, %v2168
        %v2192 = vadd.f32 %v2102, %v2168
        %v2193 = vadd.f32 %v2104, %v2168
        %v2194 = vadd.f32 %v2107, %v2168
        %v2195 = vadd.f32 %v2109, %v2168
        %v2196 = vadd.f32 %v2112, %v2168
        %v2197 = vadd.f32 %v2114, %v2168
        %v2198 = vadd.f32 %v2117, %v2168
        %v2199 = vadd.f32 %v2119, %v2168
        %v2200 = vadd.f32 %v2122, %v2168
        %v2201 = vadd.f32 %v2124, %v2168
        %v2202 = vadd.f32 %v2127, %v2168
        %v2203 = vadd.f32 %v2129, %v2168
        %v2204 = vadd.f32 %v2132, %v2168
        %v2205 = vadd.f32 %v2134, %v2168
        %v2206 = vadd.f32 %v2137, %v2168
        %v2207 = vadd.f32 %v2139, %v2168
        %v2208 = vadd.f32 %v2142, %v2168
        %v2209 = vadd.f32 %v2144, %v2168
        %v2210 = vadd.f32 %v2147, %v2168
        %v2211 = vadd.f32 %v2149, %v2168
        %v2212 = vadd.f32 %v2152, %v2168
        %v2213 = vadd.f32 %v2154, %v2168
        %v2214 = vadd.f32 %v2157, %v2168
        %v2215 = vadd.f32 %v2159, %v2168
        %v2216 = vadd.f32 %v2162, %v2168
        %v2217 = vadd.f32 %v2164, %v2168
        %v2218 = vmax.f32 %v2170, 0.0
        %v2219 = vmax.f32 %v2171, 0.0
        %v2220 = vmax.f32 %v2172, 0.0
        %v2221 = vmax.f32 %v2173, 0.0
        %v2222 = vmax.f32 %v2174, 0.0
        %v2223 = vmax.f32 %v2175, 0.0
        %v2224 = vmax.f32 %v2176, 0.0
        %v2225 = vmax.f32 %v2177, 0.0
        %v2226 = vmax.f32 %v2178, 0.0
        %v2227 = vmax.f32 %v2179, 0.0
        %v2228 = vmax.f32 %v2180, 0.0
        %v2229 = vmax.f32 %v2181, 0.0
        %v2230 = vmax.f32 %v2182, 0.0
        %v2231 = vmax.f32 %v2183, 0.0
        %v2232 = vmax.f32 %v2184, 0.0
        %v2233 = vmax.f32 %v2185, 0.0
        %v2234 = vmax.f32 %v2186, 0.0
        %v2235 = vmax.f32 %v2187, 0.0
        %v2236 = vmax.f32 %v2188, 0.0
        %v2237 = vmax.f32 %v2189, 0.0
        %v2238 = vmax.f32 %v2190, 0.0
        %v2239 = vmax.f32 %v2191, 0.0
        %v2240 = vmax.f32 %v2192, 0.0
        %v2241 = vmax.f32 %v2193, 0.0
        %v2242 = vmax.f32 %v2194, 0.0
        %v2243 = vmax.f32 %v2195, 0.0
        %v2244 = vmax.f32 %v2196, 0.0
        %v2245 = vmax.f32 %v2197, 0.0
        %v2246 = vmax.f32 %v2198, 0.0
        %v2247 = vmax.f32 %v2199, 0.0
        %v2248 = vmax.f32 %v2200, 0.0
        %v2249 = vmax.f32 %v2201, 0.0
        %v2250 = vmax.f32 %v2202, 0.0
        %v2251 = vmax.f32 %v2203, 0.0
        %v2252 = vmax.f32 %v2204, 0.0
        %v2253 = vmax.f32 %v2205, 0.0
        %v2254 = vmax.f32 %v2206, 0.0
        %v2255 = vmax.f32 %v2207, 0.0
        %v2256 = vmax.f32 %v2208, 0.0
        %v2257 = vmax.f32 %v2209, 0.0
        %v2258 = vmax.f32 %v2210, 0.0
        %v2259 = vmax.f32 %v2211, 0.0
        %v2260 = vmax.f32 %v2212, 0.0
        %v2261 = vmax.f32 %v2213, 0.0
        %v2262 = vmax.f32 %v2214, 0.0
        %v2263 = vmax.f32 %v2215, 0.0
        %v2264 = vmax.f32 %v2216, 0.0
        %v2265 = vmax.f32 %v2217, 0.0
        %v2266 = vpack.c.bf16 %v2218, %v2218
        %v2267 = vpack.c.bf16 %v2219, %v2219
        %v2268 = vpack.c.bf16 %v2220, %v2220
        %v2269 = vpack.c.bf16 %v2221, %v2221
        %v2270 = vpack.c.bf16 %v2222, %v2222
        %v2271 = vpack.c.bf16 %v2223, %v2223
        %v2272 = vpack.c.bf16 %v2224, %v2224
        %v2273 = vpack.c.bf16 %v2225, %v2225
        %v2274 = vpack.c.bf16 %v2226, %v2226
        %v2275 = vpack.c.bf16 %v2227, %v2227
        %v2276 = vpack.c.bf16 %v2228, %v2228
        %v2277 = vpack.c.bf16 %v2229, %v2229
        %v2278 = vpack.c.bf16 %v2230, %v2230
        %v2279 = vpack.c.bf16 %v2231, %v2231
        %v2280 = vpack.c.bf16 %v2232, %v2232
        %v2281 = vpack.c.bf16 %v2233, %v2233
        %v2282 = vpack.c.bf16 %v2234, %v2234
        %v2283 = vpack.c.bf16 %v2235, %v2235
        %v2284 = vpack.c.bf16 %v2236, %v2236
        %v2285 = vpack.c.bf16 %v2237, %v2237
        %v2286 = vpack.c.bf16 %v2238, %v2238
        %v2287 = vpack.c.bf16 %v2239, %v2239
        %v2288 = vpack.c.bf16 %v2240, %v2240
        %v2289 = vpack.c.bf16 %v2241, %v2241
        %v2290 = vpack.c.bf16 %v2242, %v2242
        %v2291 = vpack.c.bf16 %v2243, %v2243
        %v2292 = vpack.c.bf16 %v2244, %v2244
        %v2293 = vpack.c.bf16 %v2245, %v2245
        %v2294 = vpack.c.bf16 %v2246, %v2246
        %v2295 = vpack.c.bf16 %v2247, %v2247
        %v2296 = vpack.c.bf16 %v2248, %v2248
        %v2297 = vpack.c.bf16 %v2249, %v2249
        %v2298 = vpack.c.bf16 %v2250, %v2250
        %v2299 = vpack.c.bf16 %v2251, %v2251
        %v2300 = vpack.c.bf16 %v2252, %v2252
        %v2301 = vpack.c.bf16 %v2253, %v2253
        %v2302 = vpack.c.bf16 %v2254, %v2254
        %v2303 = vpack.c.bf16 %v2255, %v2255
        %v2304 = vpack.c.bf16 %v2256, %v2256
        %v2305 = vpack.c.bf16 %v2257, %v2257
        %v2306 = vpack.c.bf16 %v2258, %v2258
        %v2307 = vpack.c.bf16 %v2259, %v2259
        %v2308 = vpack.c.bf16 %v2260, %v2260
        %v2309 = vpack.c.bf16 %v2261, %v2261
        %v2310 = vpack.c.bf16 %v2262, %v2262
        %v2311 = vpack.c.bf16 %v2263, %v2263
        %v2312 = vpack.c.bf16 %v2264, %v2264
        %v2313 = vpack.c.bf16 %v2265, %v2265
        %s2314 = ssub.s32 1, %s441
        %s2315 = smul.u32 %s2314, 48
        %s2316 = smul.addr %s2315, 4
        %s2317 = scalar_lea.vmem [#allocation2], %s2316
        %2318 = vst [vmem:[%s2317] sm:$0xf] %v2266
        %2319 = vst [vmem:[%s2317 + $0x4] sm:$0xf] %v2267
        %2320 = vst [vmem:[%s2317 + $0x8] sm:$0xf] %v2268
        %2321 = vst [vmem:[%s2317 + $0xc] sm:$0xf] %v2269
        %2322 = vst [vmem:[%s2317 + $0x10] sm:$0xf] %v2270
        %2323 = vst [vmem:[%s2317 + $0x14] sm:$0xf] %v2271
        %2324 = vst [vmem:[%s2317 + $0x18] sm:$0xf] %v2272
        %2325 = vst [vmem:[%s2317 + $0x1c] sm:$0xf] %v2273
        %2326 = vst [vmem:[%s2317 + $0x20] sm:$0xf] %v2274
        %2327 = vst [vmem:[%s2317 + $0x24] sm:$0xf] %v2275
        %2328 = vst [vmem:[%s2317 + $0x28] sm:$0xf] %v2276
        %2329 = vst [vmem:[%s2317 + $0x2c] sm:$0xf] %v2277
        %2330 = vst [vmem:[%s2317 + $0x30] sm:$0xf] %v2278
        %2331 = vst [vmem:[%s2317 + $0x34] sm:$0xf] %v2279
        %2332 = vst [vmem:[%s2317 + $0x38] sm:$0xf] %v2280
        %2333 = vst [vmem:[%s2317 + $0x3c] sm:$0xf] %v2281
        %2334 = vst [vmem:[%s2317 + $0x40] sm:$0xf] %v2282
        %2335 = vst [vmem:[%s2317 + $0x44] sm:$0xf] %v2283
        %2336 = vst [vmem:[%s2317 + $0x48] sm:$0xf] %v2284
        %2337 = vst [vmem:[%s2317 + $0x4c] sm:$0xf] %v2285
        %2338 = vst [vmem:[%s2317 + $0x50] sm:$0xf] %v2286
        %2339 = vst [vmem:[%s2317 + $0x54] sm:$0xf] %v2287
        %2340 = vst [vmem:[%s2317 + $0x58] sm:$0xf] %v2288
        %2341 = vst [vmem:[%s2317 + $0x5c] sm:$0xf] %v2289
        %2342 = vst [vmem:[%s2317 + $0x60] sm:$0xf] %v2290
        %2343 = vst [vmem:[%s2317 + $0x64] sm:$0xf] %v2291
        %2344 = vst [vmem:[%s2317 + $0x68] sm:$0xf] %v2292
        %2345 = vst [vmem:[%s2317 + $0x6c] sm:$0xf] %v2293
        %2346 = vst [vmem:[%s2317 + $0x70] sm:$0xf] %v2294
        %2347 = vst [vmem:[%s2317 + $0x74] sm:$0xf] %v2295
        %2348 = vst [vmem:[%s2317 + $0x78] sm:$0xf] %v2296
        %2349 = vst [vmem:[%s2317 + $0x7c] sm:$0xf] %v2297
        %2350 = vst [vmem:[%s2317 + $0x80] sm:$0xf] %v2298
        %2351 = vst [vmem:[%s2317 + $0x84] sm:$0xf] %v2299
        %2352 = vst [vmem:[%s2317 + $0x88] sm:$0xf] %v2300
        %2353 = vst [vmem:[%s2317 + $0x8c] sm:$0xf] %v2301
        %2354 = vst [vmem:[%s2317 + $0x90] sm:$0xf] %v2302
        %2355 = vst [vmem:[%s2317 + $0x94] sm:$0xf] %v2303
        %2356 = vst [vmem:[%s2317 + $0x98] sm:$0xf] %v2304
        %2357 = vst [vmem:[%s2317 + $0x9c] sm:$0xf] %v2305
        %2358 = vst [vmem:[%s2317 + $0xa0] sm:$0xf] %v2306
        %2359 = vst [vmem:[%s2317 + $0xa4] sm:$0xf] %v2307
        %2360 = vst [vmem:[%s2317 + $0xa8] sm:$0xf] %v2308
        %2361 = vst [vmem:[%s2317 + $0xac] sm:$0xf] %v2309
        %2362 = vst [vmem:[%s2317 + $0xb0] sm:$0xf] %v2310
        %2363 = vst [vmem:[%s2317 + $0xb4] sm:$0xf] %v2311
        %2364 = vst [vmem:[%s2317 + $0xb8] sm:$0xf] %v2312
        %2365 = vst [vmem:[%s2317 + $0xbc] sm:$0xf] %v2313
        %2366 = vst [vmem:[#allocation9] sm:$0xf] %v2266
        %2367 = vst [vmem:[#allocation9 + $0x4] sm:$0xf] %v2267
        %2368 = vst [vmem:[#allocation9 + $0x8] sm:$0xf] %v2268
        %2369 = vst [vmem:[#allocation9 + $0xc] sm:$0xf] %v2269
        %2370 = vst [vmem:[#allocation9 + $0x10] sm:$0xf] %v2270
        %2371 = vst [vmem:[#allocation9 + $0x14] sm:$0xf] %v2271
        %2372 = vst [vmem:[#allocation9 + $0x18] sm:$0xf] %v2272
        %2373 = vst [vmem:[#allocation9 + $0x1c] sm:$0xf] %v2273
        %2374 = vst [vmem:[#allocation9 + $0x20] sm:$0xf] %v2274
        %2375 = vst [vmem:[#allocation9 + $0x24] sm:$0xf] %v2275
        %2376 = vst [vmem:[#allocation9 + $0x28] sm:$0xf] %v2276
        %2377 = vst [vmem:[#allocation9 + $0x2c] sm:$0xf] %v2277
        %2378 = vst [vmem:[#allocation9 + $0x30] sm:$0xf] %v2278
        %2379 = vst [vmem:[#allocation9 + $0x34] sm:$0xf] %v2279
        %2380 = vst [vmem:[#allocation9 + $0x38] sm:$0xf] %v2280
        %2381 = vst [vmem:[#allocation9 + $0x3c] sm:$0xf] %v2281
        %2382 = vst [vmem:[#allocation9 + $0x40] sm:$0xf] %v2282
        %2383 = vst [vmem:[#allocation9 + $0x44] sm:$0xf] %v2283
        %2384 = vst [vmem:[#allocation9 + $0x48] sm:$0xf] %v2284
        %2385 = vst [vmem:[#allocation9 + $0x4c] sm:$0xf] %v2285
        %2386 = vst [vmem:[#allocation9 + $0x50] sm:$0xf] %v2286
        %2387 = vst [vmem:[#allocation9 + $0x54] sm:$0xf] %v2287
        %2388 = vst [vmem:[#allocation9 + $0x58] sm:$0xf] %v2288
        %2389 = vst [vmem:[#allocation9 + $0x5c] sm:$0xf] %v2289
        %2390 = vst [vmem:[#allocation9 + $0x60] sm:$0xf] %v2290
        %2391 = vst [vmem:[#allocation9 + $0x64] sm:$0xf] %v2291
        %2392 = vst [vmem:[#allocation9 + $0x68] sm:$0xf] %v2292
        %2393 = vst [vmem:[#allocation9 + $0x6c] sm:$0xf] %v2293
        %2394 = vst [vmem:[#allocation9 + $0x70] sm:$0xf] %v2294
        %2395 = vst [vmem:[#allocation9 + $0x74] sm:$0xf] %v2295
        %2396 = vst [vmem:[#allocation9 + $0x78] sm:$0xf] %v2296
        %2397 = vst [vmem:[#allocation9 + $0x7c] sm:$0xf] %v2297
        %2398 = vst [vmem:[#allocation9 + $0x80] sm:$0xf] %v2298
        %2399 = vst [vmem:[#allocation9 + $0x84] sm:$0xf] %v2299
        %2400 = vst [vmem:[#allocation9 + $0x88] sm:$0xf] %v2300
        %2401 = vst [vmem:[#allocation9 + $0x8c] sm:$0xf] %v2301
        %2402 = vst [vmem:[#allocation9 + $0x90] sm:$0xf] %v2302
        %2403 = vst [vmem:[#allocation9 + $0x94] sm:$0xf] %v2303
        %2404 = vst [vmem:[#allocation9 + $0x98] sm:$0xf] %v2304
        %2405 = vst [vmem:[#allocation9 + $0x9c] sm:$0xf] %v2305
        %2406 = vst [vmem:[#allocation9 + $0xa0] sm:$0xf] %v2306
        %2407 = vst [vmem:[#allocation9 + $0xa4] sm:$0xf] %v2307
        %2408 = vst [vmem:[#allocation9 + $0xa8] sm:$0xf] %v2308
        %2409 = vst [vmem:[#allocation9 + $0xac] sm:$0xf] %v2309
        %2410 = vst [vmem:[#allocation9 + $0xb0] sm:$0xf] %v2310
        %2411 = vst [vmem:[#allocation9 + $0xb4] sm:$0xf] %v2311
        %2412 = vst [vmem:[#allocation9 + $0xb8] sm:$0xf] %v2312
        %2413 = vst [vmem:[#allocation9 + $0xbc] sm:$0xf] %v2313
        // Predicated region
        $region61: #{tpu_custom_call.1} parent=43 // pred_check
          %p2414 = pneg %p176
        $region62: #{tpu_custom_call.1} parent=43 // pred_check_branch
          %2416 = sbr.rel (%p2414) target = $region64
        $region63: #{tpu_custom_call.1} parent=43 // pred_region
          %2418 = vsyncadd [#allocation5], 0
          %s2419 = sshll.u32 [#allocation9], 4
          %s2420 = int_to_ptr.vmem [resolvable:$true] %s2419
          %s2421 = sshll.u32 %s6, 4
          %s2422 = int_to_ptr.hbm [resolvable:$true] %s2421
          %2427 = dma.vmem_to_hbm [thread:$0]  %s2420, 3072, %s2422, [#allocation5], 64, 64, 4
        $region64: #{tpu_custom_call.1} parent=43 // pred_fallthru
          _
        // Predicated region
        $region65: #{tpu_custom_call.1} parent=43 // pred_check
          %p2428 = pneg %p176
        $region66: #{tpu_custom_call.1} parent=43 // pred_check_branch
          %2430 = sbr.rel (%p2428) target = $region68
        $region67: #{tpu_custom_call.1} parent=43 // pred_region
          %2432 = dma.done [#allocation5], 3072
        $region68: #{tpu_custom_call.1} parent=43 // pred_fallthru
          _
      $region44: #{tpu_custom_call.1} parent=5 // pred_fallthru
        _
      %p2433 = scmp.le.s32.totalorder 2, %s17
      // Predicated region
      $region69: #{tpu_custom_call.1} parent=5 // pred_check
        %p2434 = pneg %p2433
      $region70: #{tpu_custom_call.1} parent=5 // pred_check_branch
        %2436 = sbr.rel (%p2434) target = $region72
      $region71: #{tpu_custom_call.1} parent=5 // pred_region
        %s2437 = ssub.s32 %s17, 2
      $region72: #{tpu_custom_call.1} parent=5 // pred_fallthru
        _
    $region6: #{tpu_custom_call.1} parent=1 // loop_footer
      %s21 = sadd.s32 1, %s17
    $region7: #{tpu_custom_call.1} parent=1 // loop_footer_branch
      %16 = sbr.rel target = $region3
    $region8: #{tpu_custom_call.1} parent=1 // loop_exit
      _
    %2438 = vsyncpa [#allocation4], 1
    %s2439 = scalar_lea.sflag [#allocation4], 1
    %2440 = vsyncpa %s2439, 1
    %2441 = vsyncpa [#allocation7], 1
    %s2442 = scalar_lea.sflag [#allocation7], 1
    %2443 = vsyncpa %s2442, 1
    %2444 = vsyncpa [#allocation5], 1
    %s2445 = scalar_lea.sflag [#allocation5], 1
    %2446 = vsyncpa %s2445, 1

</llo_original>
